<compile_context>
chip_gen: v7x
topology: tpu7x:2x2x1
jax: 0.10.0
libtpu: 0.0.40
codegen_flags: <defaults>
</compile_context>

<pallas_src>
import jax
import jax.numpy as jnp
from jax.experimental import pallas as pl
from jax.experimental.pallas import tpu as pltpu


def _round_up(x, m):
    return -(-x // m) * m


# ---------------------------------------------------------------------------
# Kernel 1: batched x-path + serial GRU recurrence (single grid step).
# ---------------------------------------------------------------------------
def _gru_recurrence_kernel(x_ref,       # (T, H)    bf16  embedding rows
                           h0_ref,      # (1, Hp)   f32   initial hidden (zero-padded)
                           w_ih_ref,    # (H, 3Hp)  bf16  gate-padded [r|z|n]
                           b_ih_ref,    # (1, 3Hp)  f32
                           w_hh_ref,    # (Hp, 3Hp) bf16  gate-padded [r|z|n]
                           b_hh_ref,    # (1, 3Hp)  f32
                           hall_ref,    # out (T, Hp) f32  h_t for every step
                           hfinal_ref,  # out (1, Hp) f32  final hidden state
                           gi_ref,      # scratch (T, 3Hp) f32  precomputed x-path gates
                           h_ref):      # scratch (1, Hp)  f32  carried hidden state
    T = x_ref.shape[0]
    Hp = h0_ref.shape[1]

    # Phase 1: x-path hoisted out of the recurrence (one M=T MXU matmul).
    x = jnp.maximum(x_ref[...], 0)                      # relu(embedding), bf16
    gi_ref[...] = jnp.dot(x, w_ih_ref[...],
                          preferred_element_type=jnp.float32) + b_ih_ref[...]

    # Phase 2: serial recurrence; only h @ W_hh + gate math per step.
    h_ref[...] = h0_ref[...]

    @pl.loop(0, T, unroll=T <= 16)
    def _(t):
        h = h_ref[...]                                   # (1, Hp) f32
        gh = jnp.dot(h.astype(jnp.bfloat16), w_hh_ref[...],
                     preferred_element_type=jnp.float32) + b_hh_ref[...]
        gi = gi_ref[pl.ds(t, 1), :]                      # (1, 3Hp) f32
        # PyTorch GRU gate order r, z, n; every slice starts at a 128-lane offset.
        r = jax.nn.sigmoid(gi[:, 0:Hp] + gh[:, 0:Hp])
        z = jax.nn.sigmoid(gi[:, Hp:2 * Hp] + gh[:, Hp:2 * Hp])
        n = jnp.tanh(gi[:, 2 * Hp:3 * Hp] + r * gh[:, 2 * Hp:3 * Hp])
        h_new = (1.0 - z) * n + z * h                    # padded lanes stay 0
        h_ref[...] = h_new
        hall_ref[pl.ds(t, 1), :] = h_new

    hfinal_ref[...] = h_ref[...]


# ---------------------------------------------------------------------------
# Kernel 2: batched output projection, tiled over the (padded) vocab axis.
# ---------------------------------------------------------------------------
def _projection_kernel(hall_ref,    # (T, Hp)  f32
                       w_out_ref,   # (Hp, TV) bf16
                       b_out_ref,   # (1, TV)  f32
                       logits_ref): # out (T, TV) f32 -- lane-dense store
    logits_ref[...] = (
        jnp.dot(hall_ref[...].astype(jnp.bfloat16), w_out_ref[...],
                preferred_element_type=jnp.float32) + b_out_ref[...])


# ---------------------------------------------------------------------------
# Parameter packing (math-layout f32 -> padded / bf16 kernel layout).
# ---------------------------------------------------------------------------
def pack_params(params):
    emb = params["embedding"]                        # (V, H)
    w_ih, w_hh = params["w_ih"], params["w_hh"]      # (H, 3H), gate order r,z,n
    b_ih, b_hh = params["b_ih"], params["b_hh"]      # (1, 3H)
    w_out, b_out = params["w_out"], params["b_out"]  # (H, V), (1, V)

    V, H = emb.shape
    Hp = _round_up(H, 128)       # lane-aligned gate width / hidden padding
    Vp = _round_up(V, 128)       # lane-dense logits padding

    def gate_pad(w, rows_out):
        # (rows_in, 3H) -> (rows_out, 3*Hp): each gate starts at a 128-lane multiple.
        rows_in = w.shape[0]
        out = jnp.zeros((rows_out, 3 * Hp), jnp.float32)
        for g in range(3):
            out = out.at[:rows_in, g * Hp:g * Hp + H].set(w[:, g * H:(g + 1) * H])
        return out

    w_ih_p = gate_pad(w_ih, H)         # (H, 3Hp)
    w_hh_p = gate_pad(w_hh, Hp)        # (Hp, 3Hp); padded rows/cols are zero
    b_ih_p = gate_pad(b_ih, 1)         # (1, 3Hp)
    b_hh_p = gate_pad(b_hh, 1)

    w_out_p = jnp.zeros((Hp, Vp), jnp.float32).at[:H, :V].set(w_out)
    b_out_p = jnp.zeros((1, Vp), jnp.float32).at[:, :V].set(b_out)

    return {
        "emb": emb.astype(jnp.bfloat16),
        "w_ih": w_ih_p.astype(jnp.bfloat16),
        "b_ih": b_ih_p.astype(jnp.float32),
        "w_hh": w_hh_p.astype(jnp.bfloat16),
        "b_hh": b_hh_p.astype(jnp.float32),
        "w_out": w_out_p.astype(jnp.bfloat16),
        "b_out": b_out_p.astype(jnp.float32),
        "hidden_size": H,
        "hidden_pad": Hp,
        "vocab_size": V,
        "vocab_pad": Vp,
    }


# ---------------------------------------------------------------------------
# Wrappers
# ---------------------------------------------------------------------------
def decoder_rnn_decode(tokens, hidden, kparams):
    """Run T teacher-forced decoder steps (two fused Pallas kernels).

    tokens: int32 (T,); hidden: f32 (1, 1, H).
    Returns (logits (T, V) f32, new_hidden (1, 1, H) f32).
    """
    emb = kparams["emb"]
    H, Hp = kparams["hidden_size"], kparams["hidden_pad"]
    V, Vp = kparams["vocab_size"], kparams["vocab_pad"]
    T = int(tokens.shape[0])

    # Bulk-gather the T embedding rows once (clamped so no OOB reads anywhere).
    tok = jnp.clip(tokens.reshape(T).astype(jnp.int32), 0, emb.shape[0] - 1)
    x = emb[tok]                                                    # (T, H) bf16

    h0 = jnp.zeros((1, Hp), jnp.float32).at[:, :H].set(
        hidden.reshape(1, H).astype(jnp.float32))

    vmem = pl.BlockSpec(memory_space=pltpu.MemorySpace.VMEM)

    # --- Kernel 1: x-path matmul + serial recurrence (everything resident). ---
    h_all, h_final = pl.pallas_call(
        _gru_recurrence_kernel,
        out_shape=(jax.ShapeDtypeStruct((T, Hp), jnp.float32),
                   jax.ShapeDtypeStruct((1, Hp), jnp.float32)),
        in_specs=[vmem] * 6,
        out_specs=(vmem, vmem),
        scratch_shapes=[
            pltpu.VMEM((T, 3 * Hp), jnp.float32),   # Gi for all steps
            pltpu.VMEM((1, Hp), jnp.float32),       # carried hidden state
        ],
    )(x, h0, kparams["w_ih"], kparams["b_ih"], kparams["w_hh"], kparams["b_hh"])

    # --- Kernel 2: batched output projection, vocab-tiled + parallel. ---------
    TV = min(Vp, 2048)                      # lane-dense vocab tile (mult. of 128)
    logits_p = pl.pallas_call(
        _projection_kernel,
        out_shape=jax.ShapeDtypeStruct((T, Vp), jnp.float32),
        grid=(pl.cdiv(Vp, TV),),
        in_specs=[
            pl.BlockSpec((T, Hp), lambda v: (0, 0)),
            pl.BlockSpec((Hp, TV), lambda v: (0, v)),
            pl.BlockSpec((1, TV), lambda v: (0, v)),
        ],
        out_specs=pl.BlockSpec((T, TV), lambda v: (0, v)),
        compiler_params=pltpu.CompilerParams(
            dimension_semantics=("parallel",)),     # vocab tiles are independent
    )(h_all, kparams["w_out"], kparams["b_out"])

    return logits_p[:, :V], h_final[:, :H].reshape(1, 1, H)


def decoder_rnn_forward(token, hidden, kparams):
    """Single-step forward matching DecoderRNN.forward(input, hidden)."""
    logits, h_new = decoder_rnn_decode(token.reshape(1), hidden, kparams)
    return logits, h_new


def init_params(key, hidden_size, output_size):
    ks = jax.random.split(key, 7)
    s = 0.1
    return {
        "embedding": jax.random.normal(ks[0], (output_size, hidden_size), jnp.float32) * s,
        "w_ih": jax.random.normal(ks[1], (hidden_size, 3 * hidden_size), jnp.float32) * s,
        "w_hh": jax.random.normal(ks[2], (hidden_size, 3 * hidden_size), jnp.float32) * s,
        "b_ih": jax.random.normal(ks[3], (1, 3 * hidden_size), jnp.float32) * s,
        "b_hh": jax.random.normal(ks[4], (1, 3 * hidden_size), jnp.float32) * s,
        "w_out": jax.random.normal(ks[5], (hidden_size, output_size), jnp.float32) * s,
        "b_out": jax.random.normal(ks[6], (1, output_size), jnp.float32) * s,
    }


def _reference_decode(tokens, hidden, kparams):
    """Pure-JAX reference mirroring the kernel math (bf16 weights, padded gates)."""
    H, Hp = kparams["hidden_size"], kparams["hidden_pad"]
    V = kparams["vocab_size"]
    emb = kparams["emb"]
    w_ih = kparams["w_ih"].astype(jnp.float32)
    w_hh = kparams["w_hh"].astype(jnp.float32)
    b_ih, b_hh = kparams["b_ih"], kparams["b_hh"]
    w_out = kparams["w_out"].astype(jnp.float32)
    b_out = kparams["b_out"]
    hp = jax.lax.Precision.HIGHEST

    tok = jnp.clip(tokens.astype(jnp.int32), 0, emb.shape[0] - 1)
    x = jnp.maximum(emb[tok], 0).astype(jnp.float32)                 # (T, H)
    gi_all = jnp.dot(x, w_ih, precision=hp) + b_ih                   # (T, 3Hp)

    h = jnp.zeros((1, Hp), jnp.float32).at[:, :H].set(
        hidden.reshape(1, H).astype(jnp.float32))
    hs = []
    for t in range(tokens.shape[0]):
        gi = gi_all[t:t + 1]
        gh = jnp.dot(h.astype(jnp.bfloat16).astype(jnp.float32), w_hh,
                     precision=hp) + b_hh
        r = jax.nn.sigmoid(gi[:, :Hp] + gh[:, :Hp])
        z = jax.nn.sigmoid(gi[:, Hp:2 * Hp] + gh[:, Hp:2 * Hp])
        n = jnp.tanh(gi[:, 2 * Hp:] + r * gh[:, 2 * Hp:])
        h = (1.0 - z) * n + z * h
        hs.append(h.astype(jnp.bfloat16).astype(jnp.float32))
    h_all = jnp.concatenate(hs, axis=0)                              # (T, Hp)
    logits = jnp.dot(h_all, w_out, precision=hp) + b_out             # (T, Vp)
    return logits[:, :V], h[:, :H].reshape(1, 1, H)


if __name__ == "__main__":
    hidden_size = 32
    output_size = 48
    seq_len = 8

    key = jax.random.PRNGKey(0)
    pkey, hkey, tkey = jax.random.split(key, 3)
    params = init_params(pkey, hidden_size, output_size)
    kparams = pack_params(params)

    hidden = jax.random.normal(hkey, (1, 1, hidden_size), jnp.float32) * 0.1
    tokens = jax.random.randint(tkey, (seq_len,), 0, output_size, dtype=jnp.int32)

    # Fused multi-step teacher-forced decode (the performance path).
    logits_seq, h_seq = decoder_rnn_decode(tokens, hidden, kparams)
    jax.block_until_ready((logits_seq, h_seq))

    ref_logits_seq, ref_h_seq = _reference_decode(tokens, hidden, kparams)
    assert logits_seq.shape == (seq_len, output_size)
    assert h_seq.shape == (1, 1, hidden_size)
    assert jnp.allclose(logits_seq, ref_logits_seq, atol=2e-4)
    assert jnp.allclose(h_seq, ref_h_seq, atol=2e-4)

    # Single-step call matching DecoderRNN.forward(input, hidden).
    token = jnp.array([[3]], dtype=jnp.int32)
    logits1, h1 = decoder_rnn_forward(token, hidden, kparams)
    jax.block_until_ready((logits1, h1))

    ref_logits1, ref_h1 = _reference_decode(token.reshape(1), hidden, kparams)
    assert logits1.shape == (1, output_size)
    assert h1.shape == (1, 1, hidden_size)
    assert jnp.allclose(logits1, ref_logits1, atol=2e-4)
    assert jnp.allclose(h1, ref_h1, atol=2e-4)

    print("KERNEL_OK")
</pallas_src>

<mosaic_0001>
module attributes {stable_mosaic.version = 11 : i64} {
  func.func @_gru_recurrence_kernel(%arg0: memref<8x32xbf16, #tpu.memory_space<vmem>>, %arg1: memref<1x128xf32, #tpu.memory_space<vmem>>, %arg2: memref<32x384xbf16, #tpu.memory_space<vmem>>, %arg3: memref<1x384xf32, #tpu.memory_space<vmem>>, %arg4: memref<128x384xbf16, #tpu.memory_space<vmem>>, %arg5: memref<1x384xf32, #tpu.memory_space<vmem>>, %arg6: memref<8x128xf32, #tpu.memory_space<vmem>>, %arg7: memref<1x128xf32, #tpu.memory_space<vmem>>, %arg8: memref<8x384xf32, #tpu.memory_space<vmem>>, %arg9: memref<1x128xf32, #tpu.memory_space<vmem>>) attributes {dimension_semantics = [], scalar_prefetch = 0 : i64, scratch_operands = 2 : i64, tpu.core_type = #tpu.core_type<tc>} {
    %c0 = arith.constant 0 : index
    %c0_0 = arith.constant 0 : index
    %0 = vector.load %arg0[%c0, %c0_0] : memref<8x32xbf16, #tpu.memory_space<vmem>>, vector<8x32xbf16>
    %cst = arith.constant 0.000000e+00 : bf16
    %1 = vector.broadcast %cst : bf16 to vector<8x32xbf16>
    %2 = arith.maximumf %0, %1 : vector<8x32xbf16>
    %c0_1 = arith.constant 0 : index
    %c0_2 = arith.constant 0 : index
    %3 = vector.load %arg2[%c0_1, %c0_2] : memref<32x384xbf16, #tpu.memory_space<vmem>>, vector<32x384xbf16>
    %cst_3 = arith.constant dense<0.000000e+00> : vector<8x384xf32>
    %4 = tpu.matmul %2, %3, %cst_3 {dimension_numbers = #tpu.dot_dimension_numbers<[1], [0], [0], [1], [0, 0, 1, 1], [], []>} : vector<8x32xbf16>, vector<32x384xbf16>, vector<8x384xf32> -> vector<8x384xf32>
    %c0_4 = arith.constant 0 : index
    %c0_5 = arith.constant 0 : index
    %5 = vector.load %arg3[%c0_4, %c0_5] : memref<1x384xf32, #tpu.memory_space<vmem>>, vector<1x384xf32>
    %6 = vector.broadcast %5 : vector<1x384xf32> to vector<8x384xf32>
    %7 = arith.addf %4, %6 : vector<8x384xf32>
    %c0_6 = arith.constant 0 : index
    %c0_7 = arith.constant 0 : index
    %8 = vector.load %arg8[%c0_6, %c0_7] : memref<8x384xf32, #tpu.memory_space<vmem>>, vector<8x384xf32>
    tpu.vector_store %arg8[%c0_6, %c0_7], %7 {strides = array<i32>} : memref<8x384xf32, #tpu.memory_space<vmem>>, vector<8x384xf32>,
    %c0_8 = arith.constant 0 : index
    %c0_9 = arith.constant 0 : index
    %9 = vector.load %arg1[%c0_8, %c0_9] : memref<1x128xf32, #tpu.memory_space<vmem>>, vector<1x128xf32>
    %c0_10 = arith.constant 0 : index
    %c0_11 = arith.constant 0 : index
    %10 = vector.load %arg9[%c0_10, %c0_11] : memref<1x128xf32, #tpu.memory_space<vmem>>, vector<1x128xf32>
    tpu.vector_store %arg9[%c0_10, %c0_11], %9 {strides = array<i32>} : memref<1x128xf32, #tpu.memory_space<vmem>>, vector<1x128xf32>,
    %c0_i32 = arith.constant 0 : i32
    %c1_i32 = arith.constant 1 : i32
    %11 = arith.muli %c0_i32, %c1_i32 : i32
    %c0_i32_12 = arith.constant 0 : i32
    %12 = arith.addi %c0_i32_12, %11 : i32
    %c0_13 = arith.constant 0 : index
    %c0_14 = arith.constant 0 : index
    %13 = vector.load %arg9[%c0_13, %c0_14] : memref<1x128xf32, #tpu.memory_space<vmem>>, vector<1x128xf32>
    %14 = arith.truncf %13 : vector<1x128xf32> to vector<1x128xbf16>
    %c0_15 = arith.constant 0 : index
    %c0_16 = arith.constant 0 : index
    %15 = vector.load %arg4[%c0_15, %c0_16] : memref<128x384xbf16, #tpu.memory_space<vmem>>, vector<128x384xbf16>
    %cst_17 = arith.constant dense<0.000000e+00> : vector<1x384xf32>
    %16 = tpu.matmul %14, %15, %cst_17 {dimension_numbers = #tpu.dot_dimension_numbers<[1], [0], [0], [1], [0, 0, 1, 1], [], []>} : vector<1x128xbf16>, vector<128x384xbf16>, vector<1x384xf32> -> vector<1x384xf32>
    %c0_18 = arith.constant 0 : index
    %c0_19 = arith.constant 0 : index
    %17 = vector.load %arg5[%c0_18, %c0_19] : memref<1x384xf32, #tpu.memory_space<vmem>>, vector<1x384xf32>
    %18 = arith.addf %16, %17 : vector<1x384xf32>
    %19 = arith.index_cast %12 : i32 to index
    %c0_20 = arith.constant 0 : index
    %20 = vector.load %arg8[%19, %c0_20] : memref<8x384xf32, #tpu.memory_space<vmem>>, vector<1x384xf32>
    %21 = vector.extract_strided_slice %20 {offsets = [0, 0], sizes = [1, 128], strides = [1, 1]} : vector<1x384xf32> to vector<1x128xf32>
    %22 = vector.extract_strided_slice %18 {offsets = [0, 0], sizes = [1, 128], strides = [1, 1]} : vector<1x384xf32> to vector<1x128xf32>
    %23 = arith.addf %21, %22 : vector<1x128xf32>
    %24 = arith.negf %23 : vector<1x128xf32>
    %25 = math.exp %24 : vector<1x128xf32>
    %cst_21 = arith.constant 1.000000e+00 : f32
    %26 = vector.broadcast %cst_21 : f32 to vector<1x128xf32>
    %27 = arith.addf %26, %25 : vector<1x128xf32>
    %28 = arith.divf %26, %27 : vector<1x128xf32>
    %29 = vector.extract_strided_slice %20 {offsets = [0, 128], sizes = [1, 128], strides = [1, 1]} : vector<1x384xf32> to vector<1x128xf32>
    %30 = vector.extract_strided_slice %18 {offsets = [0, 128], sizes = [1, 128], strides = [1, 1]} : vector<1x384xf32> to vector<1x128xf32>
    %31 = arith.addf %29, %30 : vector<1x128xf32>
    %32 = arith.negf %31 : vector<1x128xf32>
    %33 = math.exp %32 : vector<1x128xf32>
    %cst_22 = arith.constant 1.000000e+00 : f32
    %34 = vector.broadcast %cst_22 : f32 to vector<1x128xf32>
    %35 = arith.addf %34, %33 : vector<1x128xf32>
    %36 = arith.divf %34, %35 : vector<1x128xf32>
    %37 = vector.extract_strided_slice %20 {offsets = [0, 256], sizes = [1, 128], strides = [1, 1]} : vector<1x384xf32> to vector<1x128xf32>
    %38 = vector.extract_strided_slice %18 {offsets = [0, 256], sizes = [1, 128], strides = [1, 1]} : vector<1x384xf32> to vector<1x128xf32>
    %39 = arith.mulf %28, %38 : vector<1x128xf32>
    %40 = arith.addf %37, %39 : vector<1x128xf32>
    %41 = math.tanh %40 : vector<1x128xf32>
    %cst_23 = arith.constant 1.000000e+00 : f32
    %42 = vector.broadcast %cst_23 : f32 to vector<1x128xf32>
    %43 = arith.subf %42, %36 : vector<1x128xf32>
    %44 = arith.mulf %43, %41 : vector<1x128xf32>
    %45 = arith.mulf %36, %13 : vector<1x128xf32>
    %46 = arith.addf %44, %45 : vector<1x128xf32>
    %c0_24 = arith.constant 0 : index
    %c0_25 = arith.constant 0 : index
    %47 = vector.load %arg9[%c0_24, %c0_25] : memref<1x128xf32, #tpu.memory_space<vmem>>, vector<1x128xf32>
    tpu.vector_store %arg9[%c0_24, %c0_25], %46 {strides = array<i32>} : memref<1x128xf32, #tpu.memory_space<vmem>>, vector<1x128xf32>,
    %48 = arith.index_cast %12 : i32 to index
    %c0_26 = arith.constant 0 : index
    %49 = vector.load %arg6[%48, %c0_26] : memref<8x128xf32, #tpu.memory_space<vmem>>, vector<1x128xf32>
    tpu.vector_store %arg6[%48, %c0_26], %46 {strides = array<i32>} : memref<8x128xf32, #tpu.memory_space<vmem>>, vector<1x128xf32>,
    %c1_i32_27 = arith.constant 1 : i32
    %c1_i32_28 = arith.constant 1 : i32
    %50 = arith.muli %c1_i32_27, %c1_i32_28 : i32
    %c0_i32_29 = arith.constant 0 : i32
    %51 = arith.addi %c0_i32_29, %50 : i32
    %c0_30 = arith.constant 0 : index
    %c0_31 = arith.constant 0 : index
    %52 = vector.load %arg9[%c0_30, %c0_31] : memref<1x128xf32, #tpu.memory_space<vmem>>, vector<1x128xf32>
    %53 = arith.truncf %52 : vector<1x128xf32> to vector<1x128xbf16>
    %c0_32 = arith.constant 0 : index
    %c0_33 = arith.constant 0 : index
    %54 = vector.load %arg4[%c0_32, %c0_33] : memref<128x384xbf16, #tpu.memory_space<vmem>>, vector<128x384xbf16>
    %cst_34 = arith.constant dense<0.000000e+00> : vector<1x384xf32>
    %55 = tpu.matmul %53, %54, %cst_34 {dimension_numbers = #tpu.dot_dimension_numbers<[1], [0], [0], [1], [0, 0, 1, 1], [], []>} : vector<1x128xbf16>, vector<128x384xbf16>, vector<1x384xf32> -> vector<1x384xf32>
    %c0_35 = arith.constant 0 : index
    %c0_36 = arith.constant 0 : index
    %56 = vector.load %arg5[%c0_35, %c0_36] : memref<1x384xf32, #tpu.memory_space<vmem>>, vector<1x384xf32>
    %57 = arith.addf %55, %56 : vector<1x384xf32>
    %58 = arith.index_cast %51 : i32 to index
    %c0_37 = arith.constant 0 : index
    %59 = vector.load %arg8[%58, %c0_37] : memref<8x384xf32, #tpu.memory_space<vmem>>, vector<1x384xf32>
    %60 = vector.extract_strided_slice %59 {offsets = [0, 0], sizes = [1, 128], strides = [1, 1]} : vector<1x384xf32> to vector<1x128xf32>
    %61 = vector.extract_strided_slice %57 {offsets = [0, 0], sizes = [1, 128], strides = [1, 1]} : vector<1x384xf32> to vector<1x128xf32>
    %62 = arith.addf %60, %61 : vector<1x128xf32>
    %63 = arith.negf %62 : vector<1x128xf32>
    %64 = math.exp %63 : vector<1x128xf32>
    %cst_38 = arith.constant 1.000000e+00 : f32
    %65 = vector.broadcast %cst_38 : f32 to vector<1x128xf32>
    %66 = arith.addf %65, %64 : vector<1x128xf32>
    %67 = arith.divf %65, %66 : vector<1x128xf32>
    %68 = vector.extract_strided_slice %59 {offsets = [0, 128], sizes = [1, 128], strides = [1, 1]} : vector<1x384xf32> to vector<1x128xf32>
    %69 = vector.extract_strided_slice %57 {offsets = [0, 128], sizes = [1, 128], strides = [1, 1]} : vector<1x384xf32> to vector<1x128xf32>
    %70 = arith.addf %68, %69 : vector<1x128xf32>
    %71 = arith.negf %70 : vector<1x128xf32>
    %72 = math.exp %71 : vector<1x128xf32>
    %cst_39 = arith.constant 1.000000e+00 : f32
    %73 = vector.broadcast %cst_39 : f32 to vector<1x128xf32>
    %74 = arith.addf %73, %72 : vector<1x128xf32>
    %75 = arith.divf %73, %74 : vector<1x128xf32>
    %76 = vector.extract_strided_slice %59 {offsets = [0, 256], sizes = [1, 128], strides = [1, 1]} : vector<1x384xf32> to vector<1x128xf32>
    %77 = vector.extract_strided_slice %57 {offsets = [0, 256], sizes = [1, 128], strides = [1, 1]} : vector<1x384xf32> to vector<1x128xf32>
    %78 = arith.mulf %67, %77 : vector<1x128xf32>
    %79 = arith.addf %76, %78 : vector<1x128xf32>
    %80 = math.tanh %79 : vector<1x128xf32>
    %cst_40 = arith.constant 1.000000e+00 : f32
    %81 = vector.broadcast %cst_40 : f32 to vector<1x128xf32>
    %82 = arith.subf %81, %75 : vector<1x128xf32>
    %83 = arith.mulf %82, %80 : vector<1x128xf32>
    %84 = arith.mulf %75, %52 : vector<1x128xf32>
    %85 = arith.addf %83, %84 : vector<1x128xf32>
    %c0_41 = arith.constant 0 : index
    %c0_42 = arith.constant 0 : index
    %86 = vector.load %arg9[%c0_41, %c0_42] : memref<1x128xf32, #tpu.memory_space<vmem>>, vector<1x128xf32>
    tpu.vector_store %arg9[%c0_41, %c0_42], %85 {strides = array<i32>} : memref<1x128xf32, #tpu.memory_space<vmem>>, vector<1x128xf32>,
    %87 = arith.index_cast %51 : i32 to index
    %c0_43 = arith.constant 0 : index
    %88 = vector.load %arg6[%87, %c0_43] : memref<8x128xf32, #tpu.memory_space<vmem>>, vector<1x128xf32>
    tpu.vector_store %arg6[%87, %c0_43], %85 {strides = array<i32>} : memref<8x128xf32, #tpu.memory_space<vmem>>, vector<1x128xf32>,
    %c2_i32 = arith.constant 2 : i32
    %c1_i32_44 = arith.constant 1 : i32
    %89 = arith.muli %c2_i32, %c1_i32_44 : i32
    %c0_i32_45 = arith.constant 0 : i32
    %90 = arith.addi %c0_i32_45, %89 : i32
    %c0_46 = arith.constant 0 : index
    %c0_47 = arith.constant 0 : index
    %91 = vector.load %arg9[%c0_46, %c0_47] : memref<1x128xf32, #tpu.memory_space<vmem>>, vector<1x128xf32>
    %92 = arith.truncf %91 : vector<1x128xf32> to vector<1x128xbf16>
    %c0_48 = arith.constant 0 : index
    %c0_49 = arith.constant 0 : index
    %93 = vector.load %arg4[%c0_48, %c0_49] : memref<128x384xbf16, #tpu.memory_space<vmem>>, vector<128x384xbf16>
    %cst_50 = arith.constant dense<0.000000e+00> : vector<1x384xf32>
    %94 = tpu.matmul %92, %93, %cst_50 {dimension_numbers = #tpu.dot_dimension_numbers<[1], [0], [0], [1], [0, 0, 1, 1], [], []>} : vector<1x128xbf16>, vector<128x384xbf16>, vector<1x384xf32> -> vector<1x384xf32>
    %c0_51 = arith.constant 0 : index
    %c0_52 = arith.constant 0 : index
    %95 = vector.load %arg5[%c0_51, %c0_52] : memref<1x384xf32, #tpu.memory_space<vmem>>, vector<1x384xf32>
    %96 = arith.addf %94, %95 : vector<1x384xf32>
    %97 = arith.index_cast %90 : i32 to index
    %c0_53 = arith.constant 0 : index
    %98 = vector.load %arg8[%97, %c0_53] : memref<8x384xf32, #tpu.memory_space<vmem>>, vector<1x384xf32>
    %99 = vector.extract_strided_slice %98 {offsets = [0, 0], sizes = [1, 128], strides = [1, 1]} : vector<1x384xf32> to vector<1x128xf32>
    %100 = vector.extract_strided_slice %96 {offsets = [0, 0], sizes = [1, 128], strides = [1, 1]} : vector<1x384xf32> to vector<1x128xf32>
    %101 = arith.addf %99, %100 : vector<1x128xf32>
    %102 = arith.negf %101 : vector<1x128xf32>
    %103 = math.exp %102 : vector<1x128xf32>
    %cst_54 = arith.constant 1.000000e+00 : f32
    %104 = vector.broadcast %cst_54 : f32 to vector<1x128xf32>
    %105 = arith.addf %104, %103 : vector<1x128xf32>
    %106 = arith.divf %104, %105 : vector<1x128xf32>
    %107 = vector.extract_strided_slice %98 {offsets = [0, 128], sizes = [1, 128], strides = [1, 1]} : vector<1x384xf32> to vector<1x128xf32>
    %108 = vector.extract_strided_slice %96 {offsets = [0, 128], sizes = [1, 128], strides = [1, 1]} : vector<1x384xf32> to vector<1x128xf32>
    %109 = arith.addf %107, %108 : vector<1x128xf32>
    %110 = arith.negf %109 : vector<1x128xf32>
    %111 = math.exp %110 : vector<1x128xf32>
    %cst_55 = arith.constant 1.000000e+00 : f32
    %112 = vector.broadcast %cst_55 : f32 to vector<1x128xf32>
    %113 = arith.addf %112, %111 : vector<1x128xf32>
    %114 = arith.divf %112, %113 : vector<1x128xf32>
    %115 = vector.extract_strided_slice %98 {offsets = [0, 256], sizes = [1, 128], strides = [1, 1]} : vector<1x384xf32> to vector<1x128xf32>
    %116 = vector.extract_strided_slice %96 {offsets = [0, 256], sizes = [1, 128], strides = [1, 1]} : vector<1x384xf32> to vector<1x128xf32>
    %117 = arith.mulf %106, %116 : vector<1x128xf32>
    %118 = arith.addf %115, %117 : vector<1x128xf32>
    %119 = math.tanh %118 : vector<1x128xf32>
    %cst_56 = arith.constant 1.000000e+00 : f32
    %120 = vector.broadcast %cst_56 : f32 to vector<1x128xf32>
    %121 = arith.subf %120, %114 : vector<1x128xf32>
    %122 = arith.mulf %121, %119 : vector<1x128xf32>
    %123 = arith.mulf %114, %91 : vector<1x128xf32>
    %124 = arith.addf %122, %123 : vector<1x128xf32>
    %c0_57 = arith.constant 0 : index
    %c0_58 = arith.constant 0 : index
    %125 = vector.load %arg9[%c0_57, %c0_58] : memref<1x128xf32, #tpu.memory_space<vmem>>, vector<1x128xf32>
    tpu.vector_store %arg9[%c0_57, %c0_58], %124 {strides = array<i32>} : memref<1x128xf32, #tpu.memory_space<vmem>>, vector<1x128xf32>,
    %126 = arith.index_cast %90 : i32 to index
    %c0_59 = arith.constant 0 : index
    %127 = vector.load %arg6[%126, %c0_59] : memref<8x128xf32, #tpu.memory_space<vmem>>, vector<1x128xf32>
    tpu.vector_store %arg6[%126, %c0_59], %124 {strides = array<i32>} : memref<8x128xf32, #tpu.memory_space<vmem>>, vector<1x128xf32>,
    %c3_i32 = arith.constant 3 : i32
    %c1_i32_60 = arith.constant 1 : i32
    %128 = arith.muli %c3_i32, %c1_i32_60 : i32
    %c0_i32_61 = arith.constant 0 : i32
    %129 = arith.addi %c0_i32_61, %128 : i32
    %c0_62 = arith.constant 0 : index
    %c0_63 = arith.constant 0 : index
    %130 = vector.load %arg9[%c0_62, %c0_63] : memref<1x128xf32, #tpu.memory_space<vmem>>, vector<1x128xf32>
    %131 = arith.truncf %130 : vector<1x128xf32> to vector<1x128xbf16>
    %c0_64 = arith.constant 0 : index
    %c0_65 = arith.constant 0 : index
    %132 = vector.load %arg4[%c0_64, %c0_65] : memref<128x384xbf16, #tpu.memory_space<vmem>>, vector<128x384xbf16>
    %cst_66 = arith.constant dense<0.000000e+00> : vector<1x384xf32>
    %133 = tpu.matmul %131, %132, %cst_66 {dimension_numbers = #tpu.dot_dimension_numbers<[1], [0], [0], [1], [0, 0, 1, 1], [], []>} : vector<1x128xbf16>, vector<128x384xbf16>, vector<1x384xf32> -> vector<1x384xf32>
    %c0_67 = arith.constant 0 : index
    %c0_68 = arith.constant 0 : index
    %134 = vector.load %arg5[%c0_67, %c0_68] : memref<1x384xf32, #tpu.memory_space<vmem>>, vector<1x384xf32>
    %135 = arith.addf %133, %134 : vector<1x384xf32>
    %136 = arith.index_cast %129 : i32 to index
    %c0_69 = arith.constant 0 : index
    %137 = vector.load %arg8[%136, %c0_69] : memref<8x384xf32, #tpu.memory_space<vmem>>, vector<1x384xf32>
    %138 = vector.extract_strided_slice %137 {offsets = [0, 0], sizes = [1, 128], strides = [1, 1]} : vector<1x384xf32> to vector<1x128xf32>
    %139 = vector.extract_strided_slice %135 {offsets = [0, 0], sizes = [1, 128], strides = [1, 1]} : vector<1x384xf32> to vector<1x128xf32>
    %140 = arith.addf %138, %139 : vector<1x128xf32>
    %141 = arith.negf %140 : vector<1x128xf32>
    %142 = math.exp %141 : vector<1x128xf32>
    %cst_70 = arith.constant 1.000000e+00 : f32
    %143 = vector.broadcast %cst_70 : f32 to vector<1x128xf32>
    %144 = arith.addf %143, %142 : vector<1x128xf32>
    %145 = arith.divf %143, %144 : vector<1x128xf32>
    %146 = vector.extract_strided_slice %137 {offsets = [0, 128], sizes = [1, 128], strides = [1, 1]} : vector<1x384xf32> to vector<1x128xf32>
    %147 = vector.extract_strided_slice %135 {offsets = [0, 128], sizes = [1, 128], strides = [1, 1]} : vector<1x384xf32> to vector<1x128xf32>
    %148 = arith.addf %146, %147 : vector<1x128xf32>
    %149 = arith.negf %148 : vector<1x128xf32>
    %150 = math.exp %149 : vector<1x128xf32>
    %cst_71 = arith.constant 1.000000e+00 : f32
    %151 = vector.broadcast %cst_71 : f32 to vector<1x128xf32>
    %152 = arith.addf %151, %150 : vector<1x128xf32>
    %153 = arith.divf %151, %152 : vector<1x128xf32>
    %154 = vector.extract_strided_slice %137 {offsets = [0, 256], sizes = [1, 128], strides = [1, 1]} : vector<1x384xf32> to vector<1x128xf32>
    %155 = vector.extract_strided_slice %135 {offsets = [0, 256], sizes = [1, 128], strides = [1, 1]} : vector<1x384xf32> to vector<1x128xf32>
    %156 = arith.mulf %145, %155 : vector<1x128xf32>
    %157 = arith.addf %154, %156 : vector<1x128xf32>
    %158 = math.tanh %157 : vector<1x128xf32>
    %cst_72 = arith.constant 1.000000e+00 : f32
    %159 = vector.broadcast %cst_72 : f32 to vector<1x128xf32>
    %160 = arith.subf %159, %153 : vector<1x128xf32>
    %161 = arith.mulf %160, %158 : vector<1x128xf32>
    %162 = arith.mulf %153, %130 : vector<1x128xf32>
    %163 = arith.addf %161, %162 : vector<1x128xf32>
    %c0_73 = arith.constant 0 : index
    %c0_74 = arith.constant 0 : index
    %164 = vector.load %arg9[%c0_73, %c0_74] : memref<1x128xf32, #tpu.memory_space<vmem>>, vector<1x128xf32>
    tpu.vector_store %arg9[%c0_73, %c0_74], %163 {strides = array<i32>} : memref<1x128xf32, #tpu.memory_space<vmem>>, vector<1x128xf32>,
    %165 = arith.index_cast %129 : i32 to index
    %c0_75 = arith.constant 0 : index
    %166 = vector.load %arg6[%165, %c0_75] : memref<8x128xf32, #tpu.memory_space<vmem>>, vector<1x128xf32>
    tpu.vector_store %arg6[%165, %c0_75], %163 {strides = array<i32>} : memref<8x128xf32, #tpu.memory_space<vmem>>, vector<1x128xf32>,
    %c4_i32 = arith.constant 4 : i32
    %c1_i32_76 = arith.constant 1 : i32
    %167 = arith.muli %c4_i32, %c1_i32_76 : i32
    %c0_i32_77 = arith.constant 0 : i32
    %168 = arith.addi %c0_i32_77, %167 : i32
    %c0_78 = arith.constant 0 : index
    %c0_79 = arith.constant 0 : index
    %169 = vector.load %arg9[%c0_78, %c0_79] : memref<1x128xf32, #tpu.memory_space<vmem>>, vector<1x128xf32>
    %170 = arith.truncf %169 : vector<1x128xf32> to vector<1x128xbf16>
    %c0_80 = arith.constant 0 : index
    %c0_81 = arith.constant 0 : index
    %171 = vector.load %arg4[%c0_80, %c0_81] : memref<128x384xbf16, #tpu.memory_space<vmem>>, vector<128x384xbf16>
    %cst_82 = arith.constant dense<0.000000e+00> : vector<1x384xf32>
    %172 = tpu.matmul %170, %171, %cst_82 {dimension_numbers = #tpu.dot_dimension_numbers<[1], [0], [0], [1], [0, 0, 1, 1], [], []>} : vector<1x128xbf16>, vector<128x384xbf16>, vector<1x384xf32> -> vector<1x384xf32>
    %c0_83 = arith.constant 0 : index
    %c0_84 = arith.constant 0 : index
    %173 = vector.load %arg5[%c0_83, %c0_84] : memref<1x384xf32, #tpu.memory_space<vmem>>, vector<1x384xf32>
    %174 = arith.addf %172, %173 : vector<1x384xf32>
    %175 = arith.index_cast %168 : i32 to index
    %c0_85 = arith.constant 0 : index
    %176 = vector.load %arg8[%175, %c0_85] : memref<8x384xf32, #tpu.memory_space<vmem>>, vector<1x384xf32>
    %177 = vector.extract_strided_slice %176 {offsets = [0, 0], sizes = [1, 128], strides = [1, 1]} : vector<1x384xf32> to vector<1x128xf32>
    %178 = vector.extract_strided_slice %174 {offsets = [0, 0], sizes = [1, 128], strides = [1, 1]} : vector<1x384xf32> to vector<1x128xf32>
    %179 = arith.addf %177, %178 : vector<1x128xf32>
    %180 = arith.negf %179 : vector<1x128xf32>
    %181 = math.exp %180 : vector<1x128xf32>
    %cst_86 = arith.constant 1.000000e+00 : f32
    %182 = vector.broadcast %cst_86 : f32 to vector<1x128xf32>
    %183 = arith.addf %182, %181 : vector<1x128xf32>
    %184 = arith.divf %182, %183 : vector<1x128xf32>
    %185 = vector.extract_strided_slice %176 {offsets = [0, 128], sizes = [1, 128], strides = [1, 1]} : vector<1x384xf32> to vector<1x128xf32>
    %186 = vector.extract_strided_slice %174 {offsets = [0, 128], sizes = [1, 128], strides = [1, 1]} : vector<1x384xf32> to vector<1x128xf32>
    %187 = arith.addf %185, %186 : vector<1x128xf32>
    %188 = arith.negf %187 : vector<1x128xf32>
    %189 = math.exp %188 : vector<1x128xf32>
    %cst_87 = arith.constant 1.000000e+00 : f32
    %190 = vector.broadcast %cst_87 : f32 to vector<1x128xf32>
    %191 = arith.addf %190, %189 : vector<1x128xf32>
    %192 = arith.divf %190, %191 : vector<1x128xf32>
    %193 = vector.extract_strided_slice %176 {offsets = [0, 256], sizes = [1, 128], strides = [1, 1]} : vector<1x384xf32> to vector<1x128xf32>
    %194 = vector.extract_strided_slice %174 {offsets = [0, 256], sizes = [1, 128], strides = [1, 1]} : vector<1x384xf32> to vector<1x128xf32>
    %195 = arith.mulf %184, %194 : vector<1x128xf32>
    %196 = arith.addf %193, %195 : vector<1x128xf32>
    %197 = math.tanh %196 : vector<1x128xf32>
    %cst_88 = arith.constant 1.000000e+00 : f32
    %198 = vector.broadcast %cst_88 : f32 to vector<1x128xf32>
    %199 = arith.subf %198, %192 : vector<1x128xf32>
    %200 = arith.mulf %199, %197 : vector<1x128xf32>
    %201 = arith.mulf %192, %169 : vector<1x128xf32>
    %202 = arith.addf %200, %201 : vector<1x128xf32>
    %c0_89 = arith.constant 0 : index
    %c0_90 = arith.constant 0 : index
    %203 = vector.load %arg9[%c0_89, %c0_90] : memref<1x128xf32, #tpu.memory_space<vmem>>, vector<1x128xf32>
    tpu.vector_store %arg9[%c0_89, %c0_90], %202 {strides = array<i32>} : memref<1x128xf32, #tpu.memory_space<vmem>>, vector<1x128xf32>,
    %204 = arith.index_cast %168 : i32 to index
    %c0_91 = arith.constant 0 : index
    %205 = vector.load %arg6[%204, %c0_91] : memref<8x128xf32, #tpu.memory_space<vmem>>, vector<1x128xf32>
    tpu.vector_store %arg6[%204, %c0_91], %202 {strides = array<i32>} : memref<8x128xf32, #tpu.memory_space<vmem>>, vector<1x128xf32>,
    %c5_i32 = arith.constant 5 : i32
    %c1_i32_92 = arith.constant 1 : i32
    %206 = arith.muli %c5_i32, %c1_i32_92 : i32
    %c0_i32_93 = arith.constant 0 : i32
    %207 = arith.addi %c0_i32_93, %206 : i32
    %c0_94 = arith.constant 0 : index
    %c0_95 = arith.constant 0 : index
    %208 = vector.load %arg9[%c0_94, %c0_95] : memref<1x128xf32, #tpu.memory_space<vmem>>, vector<1x128xf32>
    %209 = arith.truncf %208 : vector<1x128xf32> to vector<1x128xbf16>
    %c0_96 = arith.constant 0 : index
    %c0_97 = arith.constant 0 : index
    %210 = vector.load %arg4[%c0_96, %c0_97] : memref<128x384xbf16, #tpu.memory_space<vmem>>, vector<128x384xbf16>
    %cst_98 = arith.constant dense<0.000000e+00> : vector<1x384xf32>
    %211 = tpu.matmul %209, %210, %cst_98 {dimension_numbers = #tpu.dot_dimension_numbers<[1], [0], [0], [1], [0, 0, 1, 1], [], []>} : vector<1x128xbf16>, vector<128x384xbf16>, vector<1x384xf32> -> vector<1x384xf32>
    %c0_99 = arith.constant 0 : index
    %c0_100 = arith.constant 0 : index
    %212 = vector.load %arg5[%c0_99, %c0_100] : memref<1x384xf32, #tpu.memory_space<vmem>>, vector<1x384xf32>
    %213 = arith.addf %211, %212 : vector<1x384xf32>
    %214 = arith.index_cast %207 : i32 to index
    %c0_101 = arith.constant 0 : index
    %215 = vector.load %arg8[%214, %c0_101] : memref<8x384xf32, #tpu.memory_space<vmem>>, vector<1x384xf32>
    %216 = vector.extract_strided_slice %215 {offsets = [0, 0], sizes = [1, 128], strides = [1, 1]} : vector<1x384xf32> to vector<1x128xf32>
    %217 = vector.extract_strided_slice %213 {offsets = [0, 0], sizes = [1, 128], strides = [1, 1]} : vector<1x384xf32> to vector<1x128xf32>
    %218 = arith.addf %216, %217 : vector<1x128xf32>
    %219 = arith.negf %218 : vector<1x128xf32>
    %220 = math.exp %219 : vector<1x128xf32>
    %cst_102 = arith.constant 1.000000e+00 : f32
    %221 = vector.broadcast %cst_102 : f32 to vector<1x128xf32>
    %222 = arith.addf %221, %220 : vector<1x128xf32>
    %223 = arith.divf %221, %222 : vector<1x128xf32>
    %224 = vector.extract_strided_slice %215 {offsets = [0, 128], sizes = [1, 128], strides = [1, 1]} : vector<1x384xf32> to vector<1x128xf32>
    %225 = vector.extract_strided_slice %213 {offsets = [0, 128], sizes = [1, 128], strides = [1, 1]} : vector<1x384xf32> to vector<1x128xf32>
    %226 = arith.addf %224, %225 : vector<1x128xf32>
    %227 = arith.negf %226 : vector<1x128xf32>
    %228 = math.exp %227 : vector<1x128xf32>
    %cst_103 = arith.constant 1.000000e+00 : f32
    %229 = vector.broadcast %cst_103 : f32 to vector<1x128xf32>
    %230 = arith.addf %229, %228 : vector<1x128xf32>
    %231 = arith.divf %229, %230 : vector<1x128xf32>
    %232 = vector.extract_strided_slice %215 {offsets = [0, 256], sizes = [1, 128], strides = [1, 1]} : vector<1x384xf32> to vector<1x128xf32>
    %233 = vector.extract_strided_slice %213 {offsets = [0, 256], sizes = [1, 128], strides = [1, 1]} : vector<1x384xf32> to vector<1x128xf32>
    %234 = arith.mulf %223, %233 : vector<1x128xf32>
    %235 = arith.addf %232, %234 : vector<1x128xf32>
    %236 = math.tanh %235 : vector<1x128xf32>
    %cst_104 = arith.constant 1.000000e+00 : f32
    %237 = vector.broadcast %cst_104 : f32 to vector<1x128xf32>
    %238 = arith.subf %237, %231 : vector<1x128xf32>
    %239 = arith.mulf %238, %236 : vector<1x128xf32>
    %240 = arith.mulf %231, %208 : vector<1x128xf32>
    %241 = arith.addf %239, %240 : vector<1x128xf32>
    %c0_105 = arith.constant 0 : index
    %c0_106 = arith.constant 0 : index
    %242 = vector.load %arg9[%c0_105, %c0_106] : memref<1x128xf32, #tpu.memory_space<vmem>>, vector<1x128xf32>
    tpu.vector_store %arg9[%c0_105, %c0_106], %241 {strides = array<i32>} : memref<1x128xf32, #tpu.memory_space<vmem>>, vector<1x128xf32>,
    %243 = arith.index_cast %207 : i32 to index
    %c0_107 = arith.constant 0 : index
    %244 = vector.load %arg6[%243, %c0_107] : memref<8x128xf32, #tpu.memory_space<vmem>>, vector<1x128xf32>
    tpu.vector_store %arg6[%243, %c0_107], %241 {strides = array<i32>} : memref<8x128xf32, #tpu.memory_space<vmem>>, vector<1x128xf32>,
    %c6_i32 = arith.constant 6 : i32
    %c1_i32_108 = arith.constant 1 : i32
    %245 = arith.muli %c6_i32, %c1_i32_108 : i32
    %c0_i32_109 = arith.constant 0 : i32
    %246 = arith.addi %c0_i32_109, %245 : i32
    %c0_110 = arith.constant 0 : index
    %c0_111 = arith.constant 0 : index
    %247 = vector.load %arg9[%c0_110, %c0_111] : memref<1x128xf32, #tpu.memory_space<vmem>>, vector<1x128xf32>
    %248 = arith.truncf %247 : vector<1x128xf32> to vector<1x128xbf16>
    %c0_112 = arith.constant 0 : index
    %c0_113 = arith.constant 0 : index
    %249 = vector.load %arg4[%c0_112, %c0_113] : memref<128x384xbf16, #tpu.memory_space<vmem>>, vector<128x384xbf16>
    %cst_114 = arith.constant dense<0.000000e+00> : vector<1x384xf32>
    %250 = tpu.matmul %248, %249, %cst_114 {dimension_numbers = #tpu.dot_dimension_numbers<[1], [0], [0], [1], [0, 0, 1, 1], [], []>} : vector<1x128xbf16>, vector<128x384xbf16>, vector<1x384xf32> -> vector<1x384xf32>
    %c0_115 = arith.constant 0 : index
    %c0_116 = arith.constant 0 : index
    %251 = vector.load %arg5[%c0_115, %c0_116] : memref<1x384xf32, #tpu.memory_space<vmem>>, vector<1x384xf32>
    %252 = arith.addf %250, %251 : vector<1x384xf32>
    %253 = arith.index_cast %246 : i32 to index
    %c0_117 = arith.constant 0 : index
    %254 = vector.load %arg8[%253, %c0_117] : memref<8x384xf32, #tpu.memory_space<vmem>>, vector<1x384xf32>
    %255 = vector.extract_strided_slice %254 {offsets = [0, 0], sizes = [1, 128], strides = [1, 1]} : vector<1x384xf32> to vector<1x128xf32>
    %256 = vector.extract_strided_slice %252 {offsets = [0, 0], sizes = [1, 128], strides = [1, 1]} : vector<1x384xf32> to vector<1x128xf32>
    %257 = arith.addf %255, %256 : vector<1x128xf32>
    %258 = arith.negf %257 : vector<1x128xf32>
    %259 = math.exp %258 : vector<1x128xf32>
    %cst_118 = arith.constant 1.000000e+00 : f32
    %260 = vector.broadcast %cst_118 : f32 to vector<1x128xf32>
    %261 = arith.addf %260, %259 : vector<1x128xf32>
    %262 = arith.divf %260, %261 : vector<1x128xf32>
    %263 = vector.extract_strided_slice %254 {offsets = [0, 128], sizes = [1, 128], strides = [1, 1]} : vector<1x384xf32> to vector<1x128xf32>
    %264 = vector.extract_strided_slice %252 {offsets = [0, 128], sizes = [1, 128], strides = [1, 1]} : vector<1x384xf32> to vector<1x128xf32>
    %265 = arith.addf %263, %264 : vector<1x128xf32>
    %266 = arith.negf %265 : vector<1x128xf32>
    %267 = math.exp %266 : vector<1x128xf32>
    %cst_119 = arith.constant 1.000000e+00 : f32
    %268 = vector.broadcast %cst_119 : f32 to vector<1x128xf32>
    %269 = arith.addf %268, %267 : vector<1x128xf32>
    %270 = arith.divf %268, %269 : vector<1x128xf32>
    %271 = vector.extract_strided_slice %254 {offsets = [0, 256], sizes = [1, 128], strides = [1, 1]} : vector<1x384xf32> to vector<1x128xf32>
    %272 = vector.extract_strided_slice %252 {offsets = [0, 256], sizes = [1, 128], strides = [1, 1]} : vector<1x384xf32> to vector<1x128xf32>
    %273 = arith.mulf %262, %272 : vector<1x128xf32>
    %274 = arith.addf %271, %273 : vector<1x128xf32>
    %275 = math.tanh %274 : vector<1x128xf32>
    %cst_120 = arith.constant 1.000000e+00 : f32
    %276 = vector.broadcast %cst_120 : f32 to vector<1x128xf32>
    %277 = arith.subf %276, %270 : vector<1x128xf32>
    %278 = arith.mulf %277, %275 : vector<1x128xf32>
    %279 = arith.mulf %270, %247 : vector<1x128xf32>
    %280 = arith.addf %278, %279 : vector<1x128xf32>
    %c0_121 = arith.constant 0 : index
    %c0_122 = arith.constant 0 : index
    %281 = vector.load %arg9[%c0_121, %c0_122] : memref<1x128xf32, #tpu.memory_space<vmem>>, vector<1x128xf32>
    tpu.vector_store %arg9[%c0_121, %c0_122], %280 {strides = array<i32>} : memref<1x128xf32, #tpu.memory_space<vmem>>, vector<1x128xf32>,
    %282 = arith.index_cast %246 : i32 to index
    %c0_123 = arith.constant 0 : index
    %283 = vector.load %arg6[%282, %c0_123] : memref<8x128xf32, #tpu.memory_space<vmem>>, vector<1x128xf32>
    tpu.vector_store %arg6[%282, %c0_123], %280 {strides = array<i32>} : memref<8x128xf32, #tpu.memory_space<vmem>>, vector<1x128xf32>,
    %c7_i32 = arith.constant 7 : i32
    %c1_i32_124 = arith.constant 1 : i32
    %284 = arith.muli %c7_i32, %c1_i32_124 : i32
    %c0_i32_125 = arith.constant 0 : i32
    %285 = arith.addi %c0_i32_125, %284 : i32
    %c0_126 = arith.constant 0 : index
    %c0_127 = arith.constant 0 : index
    %286 = vector.load %arg9[%c0_126, %c0_127] : memref<1x128xf32, #tpu.memory_space<vmem>>, vector<1x128xf32>
    %287 = arith.truncf %286 : vector<1x128xf32> to vector<1x128xbf16>
    %c0_128 = arith.constant 0 : index
    %c0_129 = arith.constant 0 : index
    %288 = vector.load %arg4[%c0_128, %c0_129] : memref<128x384xbf16, #tpu.memory_space<vmem>>, vector<128x384xbf16>
    %cst_130 = arith.constant dense<0.000000e+00> : vector<1x384xf32>
    %289 = tpu.matmul %287, %288, %cst_130 {dimension_numbers = #tpu.dot_dimension_numbers<[1], [0], [0], [1], [0, 0, 1, 1], [], []>} : vector<1x128xbf16>, vector<128x384xbf16>, vector<1x384xf32> -> vector<1x384xf32>
    %c0_131 = arith.constant 0 : index
    %c0_132 = arith.constant 0 : index
    %290 = vector.load %arg5[%c0_131, %c0_132] : memref<1x384xf32, #tpu.memory_space<vmem>>, vector<1x384xf32>
    %291 = arith.addf %289, %290 : vector<1x384xf32>
    %292 = arith.index_cast %285 : i32 to index
    %c0_133 = arith.constant 0 : index
    %293 = vector.load %arg8[%292, %c0_133] : memref<8x384xf32, #tpu.memory_space<vmem>>, vector<1x384xf32>
    %294 = vector.extract_strided_slice %293 {offsets = [0, 0], sizes = [1, 128], strides = [1, 1]} : vector<1x384xf32> to vector<1x128xf32>
    %295 = vector.extract_strided_slice %291 {offsets = [0, 0], sizes = [1, 128], strides = [1, 1]} : vector<1x384xf32> to vector<1x128xf32>
    %296 = arith.addf %294, %295 : vector<1x128xf32>
    %297 = arith.negf %296 : vector<1x128xf32>
    %298 = math.exp %297 : vector<1x128xf32>
    %cst_134 = arith.constant 1.000000e+00 : f32
    %299 = vector.broadcast %cst_134 : f32 to vector<1x128xf32>
    %300 = arith.addf %299, %298 : vector<1x128xf32>
    %301 = arith.divf %299, %300 : vector<1x128xf32>
    %302 = vector.extract_strided_slice %293 {offsets = [0, 128], sizes = [1, 128], strides = [1, 1]} : vector<1x384xf32> to vector<1x128xf32>
    %303 = vector.extract_strided_slice %291 {offsets = [0, 128], sizes = [1, 128], strides = [1, 1]} : vector<1x384xf32> to vector<1x128xf32>
    %304 = arith.addf %302, %303 : vector<1x128xf32>
    %305 = arith.negf %304 : vector<1x128xf32>
    %306 = math.exp %305 : vector<1x128xf32>
    %cst_135 = arith.constant 1.000000e+00 : f32
    %307 = vector.broadcast %cst_135 : f32 to vector<1x128xf32>
    %308 = arith.addf %307, %306 : vector<1x128xf32>
    %309 = arith.divf %307, %308 : vector<1x128xf32>
    %310 = vector.extract_strided_slice %293 {offsets = [0, 256], sizes = [1, 128], strides = [1, 1]} : vector<1x384xf32> to vector<1x128xf32>
    %311 = vector.extract_strided_slice %291 {offsets = [0, 256], sizes = [1, 128], strides = [1, 1]} : vector<1x384xf32> to vector<1x128xf32>
    %312 = arith.mulf %301, %311 : vector<1x128xf32>
    %313 = arith.addf %310, %312 : vector<1x128xf32>
    %314 = math.tanh %313 : vector<1x128xf32>
    %cst_136 = arith.constant 1.000000e+00 : f32
    %315 = vector.broadcast %cst_136 : f32 to vector<1x128xf32>
    %316 = arith.subf %315, %309 : vector<1x128xf32>
    %317 = arith.mulf %316, %314 : vector<1x128xf32>
    %318 = arith.mulf %309, %286 : vector<1x128xf32>
    %319 = arith.addf %317, %318 : vector<1x128xf32>
    %c0_137 = arith.constant 0 : index
    %c0_138 = arith.constant 0 : index
    %320 = vector.load %arg9[%c0_137, %c0_138] : memref<1x128xf32, #tpu.memory_space<vmem>>, vector<1x128xf32>
    tpu.vector_store %arg9[%c0_137, %c0_138], %319 {strides = array<i32>} : memref<1x128xf32, #tpu.memory_space<vmem>>, vector<1x128xf32>,
    %321 = arith.index_cast %285 : i32 to index
    %c0_139 = arith.constant 0 : index
    %322 = vector.load %arg6[%321, %c0_139] : memref<8x128xf32, #tpu.memory_space<vmem>>, vector<1x128xf32>
    tpu.vector_store %arg6[%321, %c0_139], %319 {strides = array<i32>} : memref<8x128xf32, #tpu.memory_space<vmem>>, vector<1x128xf32>,
    %c8_i32 = arith.constant 8 : i32
    %c0_140 = arith.constant 0 : index
    %c0_141 = arith.constant 0 : index
    %323 = vector.load %arg9[%c0_140, %c0_141] : memref<1x128xf32, #tpu.memory_space<vmem>>, vector<1x128xf32>
    %c0_142 = arith.constant 0 : index
    %c0_143 = arith.constant 0 : index
    %324 = vector.load %arg7[%c0_142, %c0_143] : memref<1x128xf32, #tpu.memory_space<vmem>>, vector<1x128xf32>
    tpu.vector_store %arg7[%c0_142, %c0_143], %323 {strides = array<i32>} : memref<1x128xf32, #tpu.memory_space<vmem>>, vector<1x128xf32>,
    return
  }
}

</mosaic_0001>

<llo_original>
// kernel: tpu_custom_call.1
$region0: #{tpu_custom_call.1}
  #allocation0 [shape = 'u32[]', space=smem, size = 0x4, offset = 0x4, fixed_abs, tag = 'smem constant byte address 0x4 - core index']
  #allocation1 [shape = 'u32[144,128]{1,0:T(1,128)}', space=vmem, size = 0x12000, scoped, tag = 'internal scratch']
  #allocation2 [shape = 'f32[8,384]{1,0:T(8,128)}', space=vmem, size = 0x3000, scoped, tag = 'scratch operand']
  #allocation3 [shape = 'f32[1,128]{1,0:T(1,128)}', space=vmem, size = 0x200, scoped, tag = 'scratch operand']
  %s0 = inlined_call_operand.hbm [shape: bf16[8,32], index: 0, kind: input, shape index: {}]
  %s1 = inlined_call_operand.vmem [shape: f32[1,128], index: 1, kind: input, shape index: {}]
  %s2 = inlined_call_operand.hbm [shape: bf16[32,384], index: 2, kind: input, shape index: {}]
  %s3 = inlined_call_operand.vmem [shape: f32[1,384], index: 3, kind: input, shape index: {}]
  %s4 = inlined_call_operand.hbm [shape: bf16[128,384], index: 4, kind: input, shape index: {}]
  %s5 = inlined_call_operand.vmem [shape: f32[1,384], index: 5, kind: input, shape index: {}]
  %s6 = inlined_call_operand.hbm [shape: f32[8,128], index: 6, kind: output, shape index: {0}]
  %s7 = inlined_call_operand.hbm [shape: f32[1,128], index: 7, kind: output, shape index: {1}]
  %8 = xla_tuple %s6, %s7
  %s9 = sld [smem:[#allocation0]]
  $region54: #{tpu_custom_call.1} parent=0
    _
  %s11 = ssub.s32 1, %s9
  %s12 = scalar_select 0, %s11, %s9
  $region1: #{tpu_custom_call.1} parent=0
    #allocation4 [shape = 'u8[2048]{0}', space=vmem, size = 0x800, scoped, tag = 'input window, operand 0, single buffered']
    #allocation5 [shape = 's32[1]{0}', space=sflag, size = 0x4, scoped, tag = 'scoped memory for tpu_custom_call.1']
    #allocation6 [shape = 's32[1]{0}', space=sflag, size = 0x4, scoped, tag = 'scoped memory for tpu_custom_call.1']
    #allocation7 [shape = 'u8[24576]{0}', space=vmem, size = 0x6000, scoped, tag = 'input window, operand 2, single buffered']
    #allocation8 [shape = 's32[1]{0}', space=sflag, size = 0x4, scoped, tag = 'scoped memory for tpu_custom_call.1']
    #allocation9 [shape = 'u8[98304]{0}', space=vmem, size = 0x18000, scoped, tag = 'input window, operand 4, single buffered']
    #allocation10 [shape = 'u8[4096]{0}', space=vmem, size = 0x1000, scoped, tag = 'output window, operand 0, single buffered']
    #allocation11 [shape = 'u8[512]{0}', space=vmem, size = 0x400, scoped, tag = 'output window, operand 1, single buffered']
    #allocation12 [shape = 's32[1]{0}', space=sflag, size = 0x4, scoped, tag = 'scoped memory for tpu_custom_call.1']
    %13 = vsyncpa [#allocation5], 0
    %14 = vsyncpa [#allocation8], 0
    %15 = vsyncpa [#allocation6], 0
    %16 = vsyncpa [#allocation12], 0
    // Predicated region
    $region2: #{tpu_custom_call.1} parent=1 // pred_check
      _
    $region3: #{tpu_custom_call.1} parent=1 // pred_check_branch
      %18 = sbr.rel (0) target = $region5
    $region4: #{tpu_custom_call.1} parent=1 // pred_region
      %s20 = ssub.s32 64, 64
      %21 = vsyncadd [#allocation5], %s20
      %s23 = sshll.u32 [#allocation4], 4
      %s24 = int_to_ptr.vmem [resolvable:$true] %s23
      %26 = dma.hbm_to_vmem [thread:$0]  %s0, 64, %s24, [#allocation5]
    $region5: #{tpu_custom_call.1} parent=1 // pred_fallthru
      _
    // Predicated region
    $region6: #{tpu_custom_call.1} parent=1 // pred_check
      _
    $region7: #{tpu_custom_call.1} parent=1 // pred_check_branch
      %28 = sbr.rel (0) target = $region9
    $region8: #{tpu_custom_call.1} parent=1 // pred_region
      _
    $region9: #{tpu_custom_call.1} parent=1 // pred_fallthru
      _
    // Predicated region
    $region10: #{tpu_custom_call.1} parent=1 // pred_check
      _
    $region11: #{tpu_custom_call.1} parent=1 // pred_check_branch
      %30 = sbr.rel (0) target = $region13
    $region12: #{tpu_custom_call.1} parent=1 // pred_region
      %s32 = ssub.s32 768, 768
      %33 = vsyncadd [#allocation8], %s32
      %s34 = sshll.u32 [#allocation7], 4
      %s35 = int_to_ptr.vmem [resolvable:$true] %s34
      %40 = dma.hbm_to_vmem [thread:$0]  %s2, 768, %s35, [#allocation8], 192, 192, 12
    $region13: #{tpu_custom_call.1} parent=1 // pred_fallthru
      _
    // Predicated region
    $region14: #{tpu_custom_call.1} parent=1 // pred_check
      _
    $region15: #{tpu_custom_call.1} parent=1 // pred_check_branch
      %42 = sbr.rel (0) target = $region17
    $region16: #{tpu_custom_call.1} parent=1 // pred_region
      _
    $region17: #{tpu_custom_call.1} parent=1 // pred_fallthru
      _
    // Predicated region
    $region18: #{tpu_custom_call.1} parent=1 // pred_check
      _
    $region19: #{tpu_custom_call.1} parent=1 // pred_check_branch
      %44 = sbr.rel (0) target = $region21
    $region20: #{tpu_custom_call.1} parent=1 // pred_region
      %s46 = ssub.s32 3072, 3072
      %47 = vsyncadd [#allocation8], %s46
      %s48 = sshll.u32 [#allocation9], 4
      %s49 = int_to_ptr.vmem [resolvable:$true] %s48
      %54 = dma.hbm_to_vmem [thread:$0]  %s4, 3072, %s49, [#allocation8], 192, 192, 12
    $region21: #{tpu_custom_call.1} parent=1 // pred_fallthru
      _
    // Predicated region
    $region22: #{tpu_custom_call.1} parent=1 // pred_check
      _
    $region23: #{tpu_custom_call.1} parent=1 // pred_check_branch
      %56 = sbr.rel (0) target = $region25
    $region24: #{tpu_custom_call.1} parent=1 // pred_region
      _
    $region25: #{tpu_custom_call.1} parent=1 // pred_fallthru
      _
    // Predicated region
    $region26: #{tpu_custom_call.1} parent=1 // pred_check
      _
    $region27: #{tpu_custom_call.1} parent=1 // pred_check_branch
      %58 = sbr.rel (0) target = $region29
    $region28: #{tpu_custom_call.1} parent=1 // pred_region
      %59 = dma.done [#allocation5], 64
    $region29: #{tpu_custom_call.1} parent=1 // pred_fallthru
      _
    // Predicated region
    $region30: #{tpu_custom_call.1} parent=1 // pred_check
      _
    $region31: #{tpu_custom_call.1} parent=1 // pred_check_branch
      %61 = sbr.rel (0) target = $region33
    $region32: #{tpu_custom_call.1} parent=1 // pred_region
      %62 = dma.done [#allocation8], 768
    $region33: #{tpu_custom_call.1} parent=1 // pred_fallthru
      _
    // Predicated region
    $region34: #{tpu_custom_call.1} parent=1 // pred_check
      _
    $region35: #{tpu_custom_call.1} parent=1 // pred_check_branch
      %64 = sbr.rel (0) target = $region37
    $region36: #{tpu_custom_call.1} parent=1 // pred_region
      %65 = dma.done [#allocation8], 3072
    $region37: #{tpu_custom_call.1} parent=1 // pred_fallthru
      _
    %v67 = vld [vmem:[#allocation4] sm:$0xf]
    %v68 = vmax.bf16 %v67, 0
    %v69 = vld [vmem:[#allocation7] sm:$0xff]
    %v70 = vld [vmem:[#allocation7 + $0x8] sm:$0xf]
    %v71 = vld [vmem:[#allocation7 + $0xc] sm:$0xff]
    %v72 = vld [vmem:[#allocation7 + $0x14] sm:$0xf]
    %v73 = vld [vmem:[#allocation7 + $0x18] sm:$0xff]
    %v74 = vld [vmem:[#allocation7 + $0x20] sm:$0xf]
    %v75 = vld [vmem:[#allocation7 + $0x24] sm:$0xff]
    %v76 = vld [vmem:[#allocation7 + $0x2c] sm:$0xf]
    %v77 = vld [vmem:[%s3] sm:$0x7]
    %v79 = vlaneseq
    %v80 = vshrl.u32 %v79, 7
    %v81 = vsub.s32 0, %v80
    %v82 = vrot.slane %v77, %v81
    %v83 = vlaneseq
    %v84 = vshrl.u32 %v83, 7
    %v85 = vsub.s32 1, %v84
    %v86 = vrot.slane %v77, %v85
    %v87 = vlaneseq
    %v88 = vshrl.u32 %v87, 7
    %v89 = vsub.s32 2, %v88
    %v90 = vrot.slane %v77, %v89
    %v102 = vunpack.c.l.b16 %v69
    %v103 = vunpack.c.h.b16 %v69
    %v104 = vunpack.c.l.b16 %v70
    %v105 = vunpack.c.l.b16 %v71
    %v106 = vunpack.c.h.b16 %v71
    %v107 = vunpack.c.l.b16 %v72
    %v108 = vunpack.c.l.b16 %v73
    %v109 = vunpack.c.h.b16 %v73
    %v110 = vunpack.c.l.b16 %v74
    %v111 = vunpack.c.l.b16 %v75
    %v112 = vunpack.c.h.b16 %v75
    %v113 = vunpack.c.l.b16 %v76
    %v114 = vpack.c.b16 %v105, %v102
    %v115 = vpack.c.b16 %v106, %v103
    %v116 = vpack.c.b16 %v107, %v104
    %v117 = vpack.c.b16 %v111, %v108
    %v118 = vpack.c.b16 %v112, %v109
    %v119 = vpack.c.b16 %v113, %v110
    %vm126 = vcmask 261120
    %v128 = vsel %vm126, %v68, 0
    %130 = vmatprep.subr.bf16.mxu0 %v115
    %131 = vmatpush1.bf16.msra.mxu0 %v114
    %132 = vmatprep.subr.bf16.mxu0 %v118
    %133 = vmatpush1.bf16.msra.mxu0 %v117
    %134 = vmatprep.subr.bf16.mxu0 0
    %135 = vmatpush1.bf16.msra.mxu0 0
    %136 = vmatprep.subr.bf16.mxu0 0
    %137 = vmatpush1.bf16.msra.mxu0 0
    %138 = vmatprep.subr.bf16.mxu0 0
    %139 = vmatpush1.bf16.msra.mxu0 0
    %140 = vmatprep.subr.bf16.mxu0 0
    %141 = vmatpush1.bf16.msra.mxu0 0
    %142 = vmatprep.subr.bf16.mxu0 0
    %143 = vmatpush1.bf16.msra.mxu0 0
    %144 = vmatprep.subr.bf16.mxu0 0
    %145 = vmatpush1.bf16.msra.mxu0 0
    %146 = vmatprep.subr.bf16.mxu0 0
    %147 = vmatpush1.bf16.msra.mxu0 0
    %148 = vmatprep.subr.bf16.mxu0 0
    %149 = vmatpush1.bf16.msra.mxu0 0
    %150 = vmatprep.subr.bf16.mxu0 0
    %151 = vmatpush1.bf16.msra.mxu0 0
    %152 = vmatprep.subr.bf16.mxu0 0
    %153 = vmatpush1.bf16.msra.mxu0 0
    %154 = vmatprep.subr.bf16.mxu0 0
    %155 = vmatpush1.bf16.msra.mxu0 0
    %156 = vmatprep.subr.bf16.mxu0 0
    %157 = vmatpush1.bf16.msra.mxu0 0
    %158 = vmatprep.subr.bf16.mxu0 0
    %159 = vmatpush1.bf16.msra.mxu0 0
    %160 = vmatprep.subr.bf16.mxu0 0
    %161 = vmatpush1.bf16.msra.mxu0 0
    %162 = vmatprep.mubr.bf16.mxu0 0
    %163 = vmatmul.mubr.bf16.gmra.mrb[0].mxu0 %v128
    %v164 = vpop.f32.mrb[0].mxu0
    %v165 = vadd.f32 %v82, %v164
    %v166 = vpop.f32.mrb[0].mxu0
    %v167 = vadd.f32 %v86, %v166
    %v168 = vpop.f32.mrb[0].mxu0
    %v169 = vpop.f32.mrb[0].mxu0
    %170 = vdwg.mxu0
    %171 = vmatprep.subr.bf16.mxu0 0
    %172 = vmatpush1.bf16.msra.mxu0 %v116
    %173 = vmatprep.subr.bf16.mxu0 0
    %174 = vmatpush1.bf16.msra.mxu0 %v119
    %175 = vmatprep.subr.bf16.mxu0 0
    %176 = vmatpush1.bf16.msra.mxu0 0
    %177 = vmatprep.subr.bf16.mxu0 0
    %178 = vmatpush1.bf16.msra.mxu0 0
    %179 = vmatprep.subr.bf16.mxu0 0
    %180 = vmatpush1.bf16.msra.mxu0 0
    %181 = vmatprep.subr.bf16.mxu0 0
    %182 = vmatpush1.bf16.msra.mxu0 0
    %183 = vmatprep.subr.bf16.mxu0 0
    %184 = vmatpush1.bf16.msra.mxu0 0
    %185 = vmatprep.subr.bf16.mxu0 0
    %186 = vmatpush1.bf16.msra.mxu0 0
    %187 = vmatprep.subr.bf16.mxu0 0
    %188 = vmatpush1.bf16.msra.mxu0 0
    %189 = vmatprep.subr.bf16.mxu0 0
    %190 = vmatpush1.bf16.msra.mxu0 0
    %191 = vmatprep.subr.bf16.mxu0 0
    %192 = vmatpush1.bf16.msra.mxu0 0
    %193 = vmatprep.subr.bf16.mxu0 0
    %194 = vmatpush1.bf16.msra.mxu0 0
    %195 = vmatprep.subr.bf16.mxu0 0
    %196 = vmatpush1.bf16.msra.mxu0 0
    %197 = vmatprep.subr.bf16.mxu0 0
    %198 = vmatpush1.bf16.msra.mxu0 0
    %199 = vmatprep.subr.bf16.mxu0 0
    %200 = vmatpush1.bf16.msra.mxu0 0
    %201 = vmatprep.subr.bf16.mxu0 0
    %202 = vmatpush1.bf16.msra.mxu0 0
    %203 = vmatprep.mubr.bf16.mxu0 0
    %204 = vmatmul.mubr.bf16.gmra.mrb[0].mxu0 %v128
    %v205 = vpop.f32.mrb[0].mxu0
    %v206 = vadd.f32 %v90, %v205
    %v207 = vpop.f32.mrb[0].mxu0
    %v208 = vpop.f32.mrb[0].mxu0
    %v209 = vpop.f32.mrb[0].mxu0
    %210 = vdwg.mxu0
    %211 = vst [vmem:[#allocation2] sm:$0xff] %v165
    %212 = vst [vmem:[#allocation2 + $0x8] sm:$0xff] %v167
    %213 = vst [vmem:[#allocation2 + $0x10] sm:$0xff] %v206
    %v214 = vld [vmem:[%s1] sm:$0x1]
    %215 = vst [vmem:[#allocation3] sm:$0x1] %v214
    %v216 = vld [vmem:[#allocation3] sm:$0x1]
    %v217 = vpack.c.bf16 %v216, %v216
    %v218 = vld [vmem:[#allocation9] sm:$0xff]
    %v219 = vld [vmem:[#allocation9 + $0x8] sm:$0xf]
    %v220 = vld [vmem:[#allocation9 + $0xc] sm:$0xff]
    %v221 = vld [vmem:[#allocation9 + $0x14] sm:$0xf]
    %v222 = vld [vmem:[#allocation9 + $0x18] sm:$0xff]
    %v223 = vld [vmem:[#allocation9 + $0x20] sm:$0xf]
    %v224 = vld [vmem:[#allocation9 + $0x24] sm:$0xff]
    %v225 = vld [vmem:[#allocation9 + $0x2c] sm:$0xf]
    %v226 = vld [vmem:[#allocation9 + $0x30] sm:$0xff]
    %v227 = vld [vmem:[#allocation9 + $0x38] sm:$0xf]
    %v228 = vld [vmem:[#allocation9 + $0x3c] sm:$0xff]
    %v229 = vld [vmem:[#allocation9 + $0x44] sm:$0xf]
    %v230 = vld [vmem:[#allocation9 + $0x48] sm:$0xff]
    %v231 = vld [vmem:[#allocation9 + $0x50] sm:$0xf]
    %v232 = vld [vmem:[#allocation9 + $0x54] sm:$0xff]
    %v233 = vld [vmem:[#allocation9 + $0x5c] sm:$0xf]
    %v234 = vld [vmem:[#allocation9 + $0x60] sm:$0xff]
    %v235 = vld [vmem:[#allocation9 + $0x68] sm:$0xf]
    %v236 = vld [vmem:[#allocation9 + $0x6c] sm:$0xff]
    %v237 = vld [vmem:[#allocation9 + $0x74] sm:$0xf]
    %v238 = vld [vmem:[#allocation9 + $0x78] sm:$0xff]
    %v239 = vld [vmem:[#allocation9 + $0x80] sm:$0xf]
    %v240 = vld [vmem:[#allocation9 + $0x84] sm:$0xff]
    %v241 = vld [vmem:[#allocation9 + $0x8c] sm:$0xf]
    %v242 = vld [vmem:[#allocation9 + $0x90] sm:$0xff]
    %v243 = vld [vmem:[#allocation9 + $0x98] sm:$0xf]
    %v244 = vld [vmem:[#allocation9 + $0x9c] sm:$0xff]
    %v245 = vld [vmem:[#allocation9 + $0xa4] sm:$0xf]
    %v246 = vld [vmem:[#allocation9 + $0xa8] sm:$0xff]
    %v247 = vld [vmem:[#allocation9 + $0xb0] sm:$0xf]
    %v248 = vld [vmem:[#allocation9 + $0xb4] sm:$0xff]
    %v249 = vld [vmem:[#allocation9 + $0xbc] sm:$0xf]
    %v250 = vld [vmem:[%s5] sm:$0x7]
    %v283 = vunpack.c.l.b16 %v218
    %v284 = vunpack.c.h.b16 %v218
    %v285 = vunpack.c.l.b16 %v219
    %v286 = vunpack.c.l.b16 %v220
    %v287 = vunpack.c.h.b16 %v220
    %v288 = vunpack.c.l.b16 %v221
    %v289 = vunpack.c.l.b16 %v222
    %v290 = vunpack.c.h.b16 %v222
    %v291 = vunpack.c.l.b16 %v223
    %v292 = vunpack.c.l.b16 %v224
    %v293 = vunpack.c.h.b16 %v224
    %v294 = vunpack.c.l.b16 %v225
    %v295 = vunpack.c.l.b16 %v226
    %v296 = vunpack.c.h.b16 %v226
    %v297 = vunpack.c.l.b16 %v227
    %v298 = vunpack.c.l.b16 %v228
    %v299 = vunpack.c.h.b16 %v228
    %v300 = vunpack.c.l.b16 %v229
    %v301 = vunpack.c.l.b16 %v230
    %v302 = vunpack.c.h.b16 %v230
    %v303 = vunpack.c.l.b16 %v231
    %v304 = vunpack.c.l.b16 %v232
    %v305 = vunpack.c.h.b16 %v232
    %v306 = vunpack.c.l.b16 %v233
    %v307 = vunpack.c.l.b16 %v234
    %v308 = vunpack.c.h.b16 %v234
    %v309 = vunpack.c.l.b16 %v235
    %v310 = vunpack.c.l.b16 %v236
    %v311 = vunpack.c.h.b16 %v236
    %v312 = vunpack.c.l.b16 %v237
    %v313 = vunpack.c.l.b16 %v238
    %v314 = vunpack.c.h.b16 %v238
    %v315 = vunpack.c.l.b16 %v239
    %v316 = vunpack.c.l.b16 %v240
    %v317 = vunpack.c.h.b16 %v240
    %v318 = vunpack.c.l.b16 %v241
    %v319 = vunpack.c.l.b16 %v242
    %v320 = vunpack.c.h.b16 %v242
    %v321 = vunpack.c.l.b16 %v243
    %v322 = vunpack.c.l.b16 %v244
    %v323 = vunpack.c.h.b16 %v244
    %v324 = vunpack.c.l.b16 %v245
    %v325 = vunpack.c.l.b16 %v246
    %v326 = vunpack.c.h.b16 %v246
    %v327 = vunpack.c.l.b16 %v247
    %v328 = vunpack.c.l.b16 %v248
    %v329 = vunpack.c.h.b16 %v248
    %v330 = vunpack.c.l.b16 %v249
    %v331 = vpack.c.b16 %v286, %v283
    %v332 = vpack.c.b16 %v287, %v284
    %v333 = vpack.c.b16 %v288, %v285
    %v334 = vpack.c.b16 %v292, %v289
    %v335 = vpack.c.b16 %v293, %v290
    %v336 = vpack.c.b16 %v294, %v291
    %v337 = vpack.c.b16 %v298, %v295
    %v338 = vpack.c.b16 %v299, %v296
    %v339 = vpack.c.b16 %v300, %v297
    %v340 = vpack.c.b16 %v304, %v301
    %v341 = vpack.c.b16 %v305, %v302
    %v342 = vpack.c.b16 %v306, %v303
    %v343 = vpack.c.b16 %v310, %v307
    %v344 = vpack.c.b16 %v311, %v308
    %v345 = vpack.c.b16 %v312, %v309
    %v346 = vpack.c.b16 %v316, %v313
    %v347 = vpack.c.b16 %v317, %v314
    %v348 = vpack.c.b16 %v318, %v315
    %v349 = vpack.c.b16 %v322, %v319
    %v350 = vpack.c.b16 %v323, %v320
    %v351 = vpack.c.b16 %v324, %v321
    %v352 = vpack.c.b16 %v328, %v325
    %v353 = vpack.c.b16 %v329, %v326
    %v354 = vpack.c.b16 %v330, %v327
    %v380 = vlaneseq
    %v381 = vshrl.u32 %v380, 7
    %v382 = vsub.s32 0, %v381
    %v383 = vrot.slane %v250, %v382
    %v384 = vlaneseq
    %v385 = vshrl.u32 %v384, 7
    %v386 = vsub.s32 1, %v385
    %v387 = vrot.slane %v250, %v386
    %v388 = vlaneseq
    %v389 = vshrl.u32 %v388, 7
    %v390 = vsub.s32 2, %v389
    %v391 = vrot.slane %v250, %v390
    %395 = vmatprep.subr.bf16.mxu0 %v332
    %396 = vmatpush1.bf16.msra.mxu0 %v331
    %397 = vmatprep.subr.bf16.mxu0 %v335
    %398 = vmatpush1.bf16.msra.mxu0 %v334
    %399 = vmatprep.subr.bf16.mxu0 %v338
    %400 = vmatpush1.bf16.msra.mxu0 %v337
    %401 = vmatprep.subr.bf16.mxu0 %v341
    %402 = vmatpush1.bf16.msra.mxu0 %v340
    %403 = vmatprep.subr.bf16.mxu0 %v344
    %404 = vmatpush1.bf16.msra.mxu0 %v343
    %405 = vmatprep.subr.bf16.mxu0 %v347
    %406 = vmatpush1.bf16.msra.mxu0 %v346
    %407 = vmatprep.subr.bf16.mxu0 %v350
    %408 = vmatpush1.bf16.msra.mxu0 %v349
    %409 = vmatprep.subr.bf16.mxu0 %v353
    %410 = vmatpush1.bf16.msra.mxu0 %v352
    %411 = vmatprep.subr.bf16.mxu0 0
    %412 = vmatpush1.bf16.msra.mxu0 0
    %413 = vmatprep.subr.bf16.mxu0 0
    %414 = vmatpush1.bf16.msra.mxu0 0
    %415 = vmatprep.subr.bf16.mxu0 0
    %416 = vmatpush1.bf16.msra.mxu0 0
    %417 = vmatprep.subr.bf16.mxu0 0
    %418 = vmatpush1.bf16.msra.mxu0 0
    %419 = vmatprep.subr.bf16.mxu0 0
    %420 = vmatpush1.bf16.msra.mxu0 0
    %421 = vmatprep.subr.bf16.mxu0 0
    %422 = vmatpush1.bf16.msra.mxu0 0
    %423 = vmatprep.subr.bf16.mxu0 0
    %424 = vmatpush1.bf16.msra.mxu0 0
    %425 = vmatprep.subr.bf16.mxu0 0
    %426 = vmatpush1.bf16.msra.mxu0 0
    %427 = vmatprep.mubr.bf16.mxu0 0
    %428 = vmatmul.mubr.bf16.gmra.mrb[0].mxu0 %v217
    %v429 = vpop.f32.mrb[0].mxu0
    %v430 = vadd.f32 %v383, %v429
    %v431 = vpop.f32.mrb[0].mxu0
    %v432 = vadd.f32 %v387, %v431
    %v433 = vpop.f32.mrb[0].mxu0
    %v434 = vpop.f32.mrb[0].mxu0
    %435 = vdwg.mxu0
    %436 = vmatprep.subr.bf16.mxu0 0
    %437 = vmatpush1.bf16.msra.mxu0 %v333
    %438 = vmatprep.subr.bf16.mxu0 0
    %439 = vmatpush1.bf16.msra.mxu0 %v336
    %440 = vmatprep.subr.bf16.mxu0 0
    %441 = vmatpush1.bf16.msra.mxu0 %v339
    %442 = vmatprep.subr.bf16.mxu0 0
    %443 = vmatpush1.bf16.msra.mxu0 %v342
    %444 = vmatprep.subr.bf16.mxu0 0
    %445 = vmatpush1.bf16.msra.mxu0 %v345
    %446 = vmatprep.subr.bf16.mxu0 0
    %447 = vmatpush1.bf16.msra.mxu0 %v348
    %448 = vmatprep.subr.bf16.mxu0 0
    %449 = vmatpush1.bf16.msra.mxu0 %v351
    %450 = vmatprep.subr.bf16.mxu0 0
    %451 = vmatpush1.bf16.msra.mxu0 %v354
    %452 = vmatprep.subr.bf16.mxu0 0
    %453 = vmatpush1.bf16.msra.mxu0 0
    %454 = vmatprep.subr.bf16.mxu0 0
    %455 = vmatpush1.bf16.msra.mxu0 0
    %456 = vmatprep.subr.bf16.mxu0 0
    %457 = vmatpush1.bf16.msra.mxu0 0
    %458 = vmatprep.subr.bf16.mxu0 0
    %459 = vmatpush1.bf16.msra.mxu0 0
    %460 = vmatprep.subr.bf16.mxu0 0
    %461 = vmatpush1.bf16.msra.mxu0 0
    %462 = vmatprep.subr.bf16.mxu0 0
    %463 = vmatpush1.bf16.msra.mxu0 0
    %464 = vmatprep.subr.bf16.mxu0 0
    %465 = vmatpush1.bf16.msra.mxu0 0
    %466 = vmatprep.subr.bf16.mxu0 0
    %467 = vmatpush1.bf16.msra.mxu0 0
    %468 = vmatprep.mubr.bf16.mxu0 0
    %469 = vmatmul.mubr.bf16.gmra.mrb[0].mxu0 %v217
    %v470 = vpop.f32.mrb[0].mxu0
    %v471 = vadd.f32 %v391, %v470
    %v472 = vpop.f32.mrb[0].mxu0
    %v473 = vpop.f32.mrb[0].mxu0
    %v474 = vpop.f32.mrb[0].mxu0
    %475 = vdwg.mxu0
    %v476 = vld [vmem:[#allocation2] ss:$8 sm:$0x7]
    %v477 = vadd.f32 %v476, %v430
    %v478 = vxor.u32 %v477, 2147483648
    %v479 = vmul.f32 %v478, 1.442695
    %v480 = vpow.pop %v479
    %v481 = vadd.f32 %v480, 1.0
    %v482 = vrcp.pop %v481
    %v483 = vmul.f32 1.0, %v482
    %v485 = vrot.slane %v476, 1
    %v487 = vadd.f32 %v485, %v432
    %v488 = vxor.u32 %v487, 2147483648
    %v489 = vmul.f32 %v488, 1.442695
    %v490 = vpow.pop %v489
    %v491 = vadd.f32 %v490, 1.0
    %v492 = vrcp.pop %v491
    %v493 = vmul.f32 1.0, %v492
    %v494 = vmul.f32 %v483, %v471
    %v495 = vrot.slane %v476, 2
    %v497 = vadd.f32 %v495, %v494
    %v498 = vtanh.pop %v497
    %v499 = vsub.f32 1.0, %v493
    %v500 = vmul.f32 %v499, %v498
    %v501 = vmul.f32 %v493, %v216
    %v502 = vadd.f32 %v500, %v501
    %503 = vst [vmem:[#allocation3] sm:$0x1] %v502
    %504 = vst [vmem:[#allocation10] sm:$0x1] %v502
    %v505 = vld [vmem:[#allocation3] sm:$0x1]
    %v506 = vpack.c.bf16 %v505, %v505
    %v507 = vld [vmem:[#allocation9] sm:$0xff]
    %v508 = vld [vmem:[#allocation9 + $0x8] sm:$0xf]
    %v509 = vld [vmem:[#allocation9 + $0xc] sm:$0xff]
    %v510 = vld [vmem:[#allocation9 + $0x14] sm:$0xf]
    %v511 = vld [vmem:[#allocation9 + $0x18] sm:$0xff]
    %v512 = vld [vmem:[#allocation9 + $0x20] sm:$0xf]
    %v513 = vld [vmem:[#allocation9 + $0x24] sm:$0xff]
    %v514 = vld [vmem:[#allocation9 + $0x2c] sm:$0xf]
    %v515 = vld [vmem:[#allocation9 + $0x30] sm:$0xff]
    %v516 = vld [vmem:[#allocation9 + $0x38] sm:$0xf]
    %v517 = vld [vmem:[#allocation9 + $0x3c] sm:$0xff]
    %v518 = vld [vmem:[#allocation9 + $0x44] sm:$0xf]
    %v519 = vld [vmem:[#allocation9 + $0x48] sm:$0xff]
    %v520 = vld [vmem:[#allocation9 + $0x50] sm:$0xf]
    %v521 = vld [vmem:[#allocation9 + $0x54] sm:$0xff]
    %v522 = vld [vmem:[#allocation9 + $0x5c] sm:$0xf]
    %v523 = vld [vmem:[#allocation9 + $0x60] sm:$0xff]
    %v524 = vld [vmem:[#allocation9 + $0x68] sm:$0xf]
    %v525 = vld [vmem:[#allocation9 + $0x6c] sm:$0xff]
    %v526 = vld [vmem:[#allocation9 + $0x74] sm:$0xf]
    %v527 = vld [vmem:[#allocation9 + $0x78] sm:$0xff]
    %v528 = vld [vmem:[#allocation9 + $0x80] sm:$0xf]
    %v529 = vld [vmem:[#allocation9 + $0x84] sm:$0xff]
    %v530 = vld [vmem:[#allocation9 + $0x8c] sm:$0xf]
    %v531 = vld [vmem:[#allocation9 + $0x90] sm:$0xff]
    %v532 = vld [vmem:[#allocation9 + $0x98] sm:$0xf]
    %v533 = vld [vmem:[#allocation9 + $0x9c] sm:$0xff]
    %v534 = vld [vmem:[#allocation9 + $0xa4] sm:$0xf]
    %v535 = vld [vmem:[#allocation9 + $0xa8] sm:$0xff]
    %v536 = vld [vmem:[#allocation9 + $0xb0] sm:$0xf]
    %v537 = vld [vmem:[#allocation9 + $0xb4] sm:$0xff]
    %v538 = vld [vmem:[#allocation9 + $0xbc] sm:$0xf]
    %v539 = vld [vmem:[%s5] sm:$0x7]
    %v572 = vunpack.c.l.b16 %v507
    %v573 = vunpack.c.h.b16 %v507
    %v574 = vunpack.c.l.b16 %v508
    %v575 = vunpack.c.l.b16 %v509
    %v576 = vunpack.c.h.b16 %v509
    %v577 = vunpack.c.l.b16 %v510
    %v578 = vunpack.c.l.b16 %v511
    %v579 = vunpack.c.h.b16 %v511
    %v580 = vunpack.c.l.b16 %v512
    %v581 = vunpack.c.l.b16 %v513
    %v582 = vunpack.c.h.b16 %v513
    %v583 = vunpack.c.l.b16 %v514
    %v584 = vunpack.c.l.b16 %v515
    %v585 = vunpack.c.h.b16 %v515
    %v586 = vunpack.c.l.b16 %v516
    %v587 = vunpack.c.l.b16 %v517
    %v588 = vunpack.c.h.b16 %v517
    %v589 = vunpack.c.l.b16 %v518
    %v590 = vunpack.c.l.b16 %v519
    %v591 = vunpack.c.h.b16 %v519
    %v592 = vunpack.c.l.b16 %v520
    %v593 = vunpack.c.l.b16 %v521
    %v594 = vunpack.c.h.b16 %v521
    %v595 = vunpack.c.l.b16 %v522
    %v596 = vunpack.c.l.b16 %v523
    %v597 = vunpack.c.h.b16 %v523
    %v598 = vunpack.c.l.b16 %v524
    %v599 = vunpack.c.l.b16 %v525
    %v600 = vunpack.c.h.b16 %v525
    %v601 = vunpack.c.l.b16 %v526
    %v602 = vunpack.c.l.b16 %v527
    %v603 = vunpack.c.h.b16 %v527
    %v604 = vunpack.c.l.b16 %v528
    %v605 = vunpack.c.l.b16 %v529
    %v606 = vunpack.c.h.b16 %v529
    %v607 = vunpack.c.l.b16 %v530
    %v608 = vunpack.c.l.b16 %v531
    %v609 = vunpack.c.h.b16 %v531
    %v610 = vunpack.c.l.b16 %v532
    %v611 = vunpack.c.l.b16 %v533
    %v612 = vunpack.c.h.b16 %v533
    %v613 = vunpack.c.l.b16 %v534
    %v614 = vunpack.c.l.b16 %v535
    %v615 = vunpack.c.h.b16 %v535
    %v616 = vunpack.c.l.b16 %v536
    %v617 = vunpack.c.l.b16 %v537
    %v618 = vunpack.c.h.b16 %v537
    %v619 = vunpack.c.l.b16 %v538
    %v620 = vpack.c.b16 %v575, %v572
    %v621 = vpack.c.b16 %v576, %v573
    %v622 = vpack.c.b16 %v577, %v574
    %v623 = vpack.c.b16 %v581, %v578
    %v624 = vpack.c.b16 %v582, %v579
    %v625 = vpack.c.b16 %v583, %v580
    %v626 = vpack.c.b16 %v587, %v584
    %v627 = vpack.c.b16 %v588, %v585
    %v628 = vpack.c.b16 %v589, %v586
    %v629 = vpack.c.b16 %v593, %v590
    %v630 = vpack.c.b16 %v594, %v591
    %v631 = vpack.c.b16 %v595, %v592
    %v632 = vpack.c.b16 %v599, %v596
    %v633 = vpack.c.b16 %v600, %v597
    %v634 = vpack.c.b16 %v601, %v598
    %v635 = vpack.c.b16 %v605, %v602
    %v636 = vpack.c.b16 %v606, %v603
    %v637 = vpack.c.b16 %v607, %v604
    %v638 = vpack.c.b16 %v611, %v608
    %v639 = vpack.c.b16 %v612, %v609
    %v640 = vpack.c.b16 %v613, %v610
    %v641 = vpack.c.b16 %v617, %v614
    %v642 = vpack.c.b16 %v618, %v615
    %v643 = vpack.c.b16 %v619, %v616
    %v669 = vlaneseq
    %v670 = vshrl.u32 %v669, 7
    %v671 = vsub.s32 0, %v670
    %v672 = vrot.slane %v539, %v671
    %v673 = vlaneseq
    %v674 = vshrl.u32 %v673, 7
    %v675 = vsub.s32 1, %v674
    %v676 = vrot.slane %v539, %v675
    %v677 = vlaneseq
    %v678 = vshrl.u32 %v677, 7
    %v679 = vsub.s32 2, %v678
    %v680 = vrot.slane %v539, %v679
    %684 = vmatprep.subr.bf16.mxu0 %v621
    %685 = vmatpush1.bf16.msra.mxu0 %v620
    %686 = vmatprep.subr.bf16.mxu0 %v624
    %687 = vmatpush1.bf16.msra.mxu0 %v623
    %688 = vmatprep.subr.bf16.mxu0 %v627
    %689 = vmatpush1.bf16.msra.mxu0 %v626
    %690 = vmatprep.subr.bf16.mxu0 %v630
    %691 = vmatpush1.bf16.msra.mxu0 %v629
    %692 = vmatprep.subr.bf16.mxu0 %v633
    %693 = vmatpush1.bf16.msra.mxu0 %v632
    %694 = vmatprep.subr.bf16.mxu0 %v636
    %695 = vmatpush1.bf16.msra.mxu0 %v635
    %696 = vmatprep.subr.bf16.mxu0 %v639
    %697 = vmatpush1.bf16.msra.mxu0 %v638
    %698 = vmatprep.subr.bf16.mxu0 %v642
    %699 = vmatpush1.bf16.msra.mxu0 %v641
    %700 = vmatprep.subr.bf16.mxu0 0
    %701 = vmatpush1.bf16.msra.mxu0 0
    %702 = vmatprep.subr.bf16.mxu0 0
    %703 = vmatpush1.bf16.msra.mxu0 0
    %704 = vmatprep.subr.bf16.mxu0 0
    %705 = vmatpush1.bf16.msra.mxu0 0
    %706 = vmatprep.subr.bf16.mxu0 0
    %707 = vmatpush1.bf16.msra.mxu0 0
    %708 = vmatprep.subr.bf16.mxu0 0
    %709 = vmatpush1.bf16.msra.mxu0 0
    %710 = vmatprep.subr.bf16.mxu0 0
    %711 = vmatpush1.bf16.msra.mxu0 0
    %712 = vmatprep.subr.bf16.mxu0 0
    %713 = vmatpush1.bf16.msra.mxu0 0
    %714 = vmatprep.subr.bf16.mxu0 0
    %715 = vmatpush1.bf16.msra.mxu0 0
    %716 = vmatprep.mubr.bf16.mxu0 0
    %717 = vmatmul.mubr.bf16.gmra.mrb[0].mxu0 %v506
    %v718 = vpop.f32.mrb[0].mxu0
    %v719 = vadd.f32 %v672, %v718
    %v720 = vpop.f32.mrb[0].mxu0
    %v721 = vadd.f32 %v676, %v720
    %v722 = vpop.f32.mrb[0].mxu0
    %v723 = vpop.f32.mrb[0].mxu0
    %724 = vdwg.mxu0
    %725 = vmatprep.subr.bf16.mxu0 0
    %726 = vmatpush1.bf16.msra.mxu0 %v622
    %727 = vmatprep.subr.bf16.mxu0 0
    %728 = vmatpush1.bf16.msra.mxu0 %v625
    %729 = vmatprep.subr.bf16.mxu0 0
    %730 = vmatpush1.bf16.msra.mxu0 %v628
    %731 = vmatprep.subr.bf16.mxu0 0
    %732 = vmatpush1.bf16.msra.mxu0 %v631
    %733 = vmatprep.subr.bf16.mxu0 0
    %734 = vmatpush1.bf16.msra.mxu0 %v634
    %735 = vmatprep.subr.bf16.mxu0 0
    %736 = vmatpush1.bf16.msra.mxu0 %v637
    %737 = vmatprep.subr.bf16.mxu0 0
    %738 = vmatpush1.bf16.msra.mxu0 %v640
    %739 = vmatprep.subr.bf16.mxu0 0
    %740 = vmatpush1.bf16.msra.mxu0 %v643
    %741 = vmatprep.subr.bf16.mxu0 0
    %742 = vmatpush1.bf16.msra.mxu0 0
    %743 = vmatprep.subr.bf16.mxu0 0
    %744 = vmatpush1.bf16.msra.mxu0 0
    %745 = vmatprep.subr.bf16.mxu0 0
    %746 = vmatpush1.bf16.msra.mxu0 0
    %747 = vmatprep.subr.bf16.mxu0 0
    %748 = vmatpush1.bf16.msra.mxu0 0
    %749 = vmatprep.subr.bf16.mxu0 0
    %750 = vmatpush1.bf16.msra.mxu0 0
    %751 = vmatprep.subr.bf16.mxu0 0
    %752 = vmatpush1.bf16.msra.mxu0 0
    %753 = vmatprep.subr.bf16.mxu0 0
    %754 = vmatpush1.bf16.msra.mxu0 0
    %755 = vmatprep.subr.bf16.mxu0 0
    %756 = vmatpush1.bf16.msra.mxu0 0
    %757 = vmatprep.mubr.bf16.mxu0 0
    %758 = vmatmul.mubr.bf16.gmra.mrb[0].mxu0 %v506
    %v759 = vpop.f32.mrb[0].mxu0
    %v760 = vadd.f32 %v680, %v759
    %v761 = vpop.f32.mrb[0].mxu0
    %v762 = vpop.f32.mrb[0].mxu0
    %v763 = vpop.f32.mrb[0].mxu0
    %764 = vdwg.mxu0
    %s765 = scalar_lea.vmem [#allocation2], 1
    %v766 = vld [vmem:[%s765] ss:$8 sm:$0x7]
    %v767 = vadd.f32 %v766, %v719
    %v768 = vxor.u32 %v767, 2147483648
    %v769 = vmul.f32 %v768, 1.442695
    %v770 = vpow.pop %v769
    %v771 = vadd.f32 %v770, 1.0
    %v772 = vrcp.pop %v771
    %v773 = vmul.f32 1.0, %v772
    %v775 = vrot.slane %v766, 1
    %v777 = vadd.f32 %v775, %v721
    %v778 = vxor.u32 %v777, 2147483648
    %v779 = vmul.f32 %v778, 1.442695
    %v780 = vpow.pop %v779
    %v781 = vadd.f32 %v780, 1.0
    %v782 = vrcp.pop %v781
    %v783 = vmul.f32 1.0, %v782
    %v784 = vmul.f32 %v773, %v760
    %v785 = vrot.slane %v766, 2
    %v787 = vadd.f32 %v785, %v784
    %v788 = vtanh.pop %v787
    %v789 = vsub.f32 1.0, %v783
    %v790 = vmul.f32 %v789, %v788
    %v791 = vmul.f32 %v783, %v505
    %v792 = vadd.f32 %v790, %v791
    %793 = vst [vmem:[#allocation3] sm:$0x1] %v792
    %794 = vst [vmem:[#allocation10 + $0x1] sm:$0x1] %v792
    %v795 = vld [vmem:[#allocation3] sm:$0x1]
    %v796 = vpack.c.bf16 %v795, %v795
    %v797 = vld [vmem:[#allocation9] sm:$0xff]
    %v798 = vld [vmem:[#allocation9 + $0x8] sm:$0xf]
    %v799 = vld [vmem:[#allocation9 + $0xc] sm:$0xff]
    %v800 = vld [vmem:[#allocation9 + $0x14] sm:$0xf]
    %v801 = vld [vmem:[#allocation9 + $0x18] sm:$0xff]
    %v802 = vld [vmem:[#allocation9 + $0x20] sm:$0xf]
    %v803 = vld [vmem:[#allocation9 + $0x24] sm:$0xff]
    %v804 = vld [vmem:[#allocation9 + $0x2c] sm:$0xf]
    %v805 = vld [vmem:[#allocation9 + $0x30] sm:$0xff]
    %v806 = vld [vmem:[#allocation9 + $0x38] sm:$0xf]
    %v807 = vld [vmem:[#allocation9 + $0x3c] sm:$0xff]
    %v808 = vld [vmem:[#allocation9 + $0x44] sm:$0xf]
    %v809 = vld [vmem:[#allocation9 + $0x48] sm:$0xff]
    %v810 = vld [vmem:[#allocation9 + $0x50] sm:$0xf]
    %v811 = vld [vmem:[#allocation9 + $0x54] sm:$0xff]
    %v812 = vld [vmem:[#allocation9 + $0x5c] sm:$0xf]
    %v813 = vld [vmem:[#allocation9 + $0x60] sm:$0xff]
    %v814 = vld [vmem:[#allocation9 + $0x68] sm:$0xf]
    %v815 = vld [vmem:[#allocation9 + $0x6c] sm:$0xff]
    %v816 = vld [vmem:[#allocation9 + $0x74] sm:$0xf]
    %v817 = vld [vmem:[#allocation9 + $0x78] sm:$0xff]
    %v818 = vld [vmem:[#allocation9 + $0x80] sm:$0xf]
    %v819 = vld [vmem:[#allocation9 + $0x84] sm:$0xff]
    %v820 = vld [vmem:[#allocation9 + $0x8c] sm:$0xf]
    %v821 = vld [vmem:[#allocation9 + $0x90] sm:$0xff]
    %v822 = vld [vmem:[#allocation9 + $0x98] sm:$0xf]
    %v823 = vld [vmem:[#allocation9 + $0x9c] sm:$0xff]
    %v824 = vld [vmem:[#allocation9 + $0xa4] sm:$0xf]
    %v825 = vld [vmem:[#allocation9 + $0xa8] sm:$0xff]
    %v826 = vld [vmem:[#allocation9 + $0xb0] sm:$0xf]
    %v827 = vld [vmem:[#allocation9 + $0xb4] sm:$0xff]
    %v828 = vld [vmem:[#allocation9 + $0xbc] sm:$0xf]
    %v829 = vld [vmem:[%s5] sm:$0x7]
    %v862 = vunpack.c.l.b16 %v797
    %v863 = vunpack.c.h.b16 %v797
    %v864 = vunpack.c.l.b16 %v798
    %v865 = vunpack.c.l.b16 %v799
    %v866 = vunpack.c.h.b16 %v799
    %v867 = vunpack.c.l.b16 %v800
    %v868 = vunpack.c.l.b16 %v801
    %v869 = vunpack.c.h.b16 %v801
    %v870 = vunpack.c.l.b16 %v802
    %v871 = vunpack.c.l.b16 %v803
    %v872 = vunpack.c.h.b16 %v803
    %v873 = vunpack.c.l.b16 %v804
    %v874 = vunpack.c.l.b16 %v805
    %v875 = vunpack.c.h.b16 %v805
    %v876 = vunpack.c.l.b16 %v806
    %v877 = vunpack.c.l.b16 %v807
    %v878 = vunpack.c.h.b16 %v807
    %v879 = vunpack.c.l.b16 %v808
    %v880 = vunpack.c.l.b16 %v809
    %v881 = vunpack.c.h.b16 %v809
    %v882 = vunpack.c.l.b16 %v810
    %v883 = vunpack.c.l.b16 %v811
    %v884 = vunpack.c.h.b16 %v811
    %v885 = vunpack.c.l.b16 %v812
    %v886 = vunpack.c.l.b16 %v813
    %v887 = vunpack.c.h.b16 %v813
    %v888 = vunpack.c.l.b16 %v814
    %v889 = vunpack.c.l.b16 %v815
    %v890 = vunpack.c.h.b16 %v815
    %v891 = vunpack.c.l.b16 %v816
    %v892 = vunpack.c.l.b16 %v817
    %v893 = vunpack.c.h.b16 %v817
    %v894 = vunpack.c.l.b16 %v818
    %v895 = vunpack.c.l.b16 %v819
    %v896 = vunpack.c.h.b16 %v819
    %v897 = vunpack.c.l.b16 %v820
    %v898 = vunpack.c.l.b16 %v821
    %v899 = vunpack.c.h.b16 %v821
    %v900 = vunpack.c.l.b16 %v822
    %v901 = vunpack.c.l.b16 %v823
    %v902 = vunpack.c.h.b16 %v823
    %v903 = vunpack.c.l.b16 %v824
    %v904 = vunpack.c.l.b16 %v825
    %v905 = vunpack.c.h.b16 %v825
    %v906 = vunpack.c.l.b16 %v826
    %v907 = vunpack.c.l.b16 %v827
    %v908 = vunpack.c.h.b16 %v827
    %v909 = vunpack.c.l.b16 %v828
    %v910 = vpack.c.b16 %v865, %v862
    %v911 = vpack.c.b16 %v866, %v863
    %v912 = vpack.c.b16 %v867, %v864
    %v913 = vpack.c.b16 %v871, %v868
    %v914 = vpack.c.b16 %v872, %v869
    %v915 = vpack.c.b16 %v873, %v870
    %v916 = vpack.c.b16 %v877, %v874
    %v917 = vpack.c.b16 %v878, %v875
    %v918 = vpack.c.b16 %v879, %v876
    %v919 = vpack.c.b16 %v883, %v880
    %v920 = vpack.c.b16 %v884, %v881
    %v921 = vpack.c.b16 %v885, %v882
    %v922 = vpack.c.b16 %v889, %v886
    %v923 = vpack.c.b16 %v890, %v887
    %v924 = vpack.c.b16 %v891, %v888
    %v925 = vpack.c.b16 %v895, %v892
    %v926 = vpack.c.b16 %v896, %v893
    %v927 = vpack.c.b16 %v897, %v894
    %v928 = vpack.c.b16 %v901, %v898
    %v929 = vpack.c.b16 %v902, %v899
    %v930 = vpack.c.b16 %v903, %v900
    %v931 = vpack.c.b16 %v907, %v904
    %v932 = vpack.c.b16 %v908, %v905
    %v933 = vpack.c.b16 %v909, %v906
    %v959 = vlaneseq
    %v960 = vshrl.u32 %v959, 7
    %v961 = vsub.s32 0, %v960
    %v962 = vrot.slane %v829, %v961
    %v963 = vlaneseq
    %v964 = vshrl.u32 %v963, 7
    %v965 = vsub.s32 1, %v964
    %v966 = vrot.slane %v829, %v965
    %v967 = vlaneseq
    %v968 = vshrl.u32 %v967, 7
    %v969 = vsub.s32 2, %v968
    %v970 = vrot.slane %v829, %v969
    %974 = vmatprep.subr.bf16.mxu0 %v911
    %975 = vmatpush1.bf16.msra.mxu0 %v910
    %976 = vmatprep.subr.bf16.mxu0 %v914
    %977 = vmatpush1.bf16.msra.mxu0 %v913
    %978 = vmatprep.subr.bf16.mxu0 %v917
    %979 = vmatpush1.bf16.msra.mxu0 %v916
    %980 = vmatprep.subr.bf16.mxu0 %v920
    %981 = vmatpush1.bf16.msra.mxu0 %v919
    %982 = vmatprep.subr.bf16.mxu0 %v923
    %983 = vmatpush1.bf16.msra.mxu0 %v922
    %984 = vmatprep.subr.bf16.mxu0 %v926
    %985 = vmatpush1.bf16.msra.mxu0 %v925
    %986 = vmatprep.subr.bf16.mxu0 %v929
    %987 = vmatpush1.bf16.msra.mxu0 %v928
    %988 = vmatprep.subr.bf16.mxu0 %v932
    %989 = vmatpush1.bf16.msra.mxu0 %v931
    %990 = vmatprep.subr.bf16.mxu0 0
    %991 = vmatpush1.bf16.msra.mxu0 0
    %992 = vmatprep.subr.bf16.mxu0 0
    %993 = vmatpush1.bf16.msra.mxu0 0
    %994 = vmatprep.subr.bf16.mxu0 0
    %995 = vmatpush1.bf16.msra.mxu0 0
    %996 = vmatprep.subr.bf16.mxu0 0
    %997 = vmatpush1.bf16.msra.mxu0 0
    %998 = vmatprep.subr.bf16.mxu0 0
    %999 = vmatpush1.bf16.msra.mxu0 0
    %1000 = vmatprep.subr.bf16.mxu0 0
    %1001 = vmatpush1.bf16.msra.mxu0 0
    %1002 = vmatprep.subr.bf16.mxu0 0
    %1003 = vmatpush1.bf16.msra.mxu0 0
    %1004 = vmatprep.subr.bf16.mxu0 0
    %1005 = vmatpush1.bf16.msra.mxu0 0
    %1006 = vmatprep.mubr.bf16.mxu0 0
    %1007 = vmatmul.mubr.bf16.gmra.mrb[0].mxu0 %v796
    %v1008 = vpop.f32.mrb[0].mxu0
    %v1009 = vadd.f32 %v962, %v1008
    %v1010 = vpop.f32.mrb[0].mxu0
    %v1011 = vadd.f32 %v966, %v1010
    %v1012 = vpop.f32.mrb[0].mxu0
    %v1013 = vpop.f32.mrb[0].mxu0
    %1014 = vdwg.mxu0
    %1015 = vmatprep.subr.bf16.mxu0 0
    %1016 = vmatpush1.bf16.msra.mxu0 %v912
    %1017 = vmatprep.subr.bf16.mxu0 0
    %1018 = vmatpush1.bf16.msra.mxu0 %v915
    %1019 = vmatprep.subr.bf16.mxu0 0
    %1020 = vmatpush1.bf16.msra.mxu0 %v918
    %1021 = vmatprep.subr.bf16.mxu0 0
    %1022 = vmatpush1.bf16.msra.mxu0 %v921
    %1023 = vmatprep.subr.bf16.mxu0 0
    %1024 = vmatpush1.bf16.msra.mxu0 %v924
    %1025 = vmatprep.subr.bf16.mxu0 0
    %1026 = vmatpush1.bf16.msra.mxu0 %v927
    %1027 = vmatprep.subr.bf16.mxu0 0
    %1028 = vmatpush1.bf16.msra.mxu0 %v930
    %1029 = vmatprep.subr.bf16.mxu0 0
    %1030 = vmatpush1.bf16.msra.mxu0 %v933
    %1031 = vmatprep.subr.bf16.mxu0 0
    %1032 = vmatpush1.bf16.msra.mxu0 0
    %1033 = vmatprep.subr.bf16.mxu0 0
    %1034 = vmatpush1.bf16.msra.mxu0 0
    %1035 = vmatprep.subr.bf16.mxu0 0
    %1036 = vmatpush1.bf16.msra.mxu0 0
    %1037 = vmatprep.subr.bf16.mxu0 0
    %1038 = vmatpush1.bf16.msra.mxu0 0
    %1039 = vmatprep.subr.bf16.mxu0 0
    %1040 = vmatpush1.bf16.msra.mxu0 0
    %1041 = vmatprep.subr.bf16.mxu0 0
    %1042 = vmatpush1.bf16.msra.mxu0 0
    %1043 = vmatprep.subr.bf16.mxu0 0
    %1044 = vmatpush1.bf16.msra.mxu0 0
    %1045 = vmatprep.subr.bf16.mxu0 0
    %1046 = vmatpush1.bf16.msra.mxu0 0
    %1047 = vmatprep.mubr.bf16.mxu0 0
    %1048 = vmatmul.mubr.bf16.gmra.mrb[0].mxu0 %v796
    %v1049 = vpop.f32.mrb[0].mxu0
    %v1050 = vadd.f32 %v970, %v1049
    %v1051 = vpop.f32.mrb[0].mxu0
    %v1052 = vpop.f32.mrb[0].mxu0
    %v1053 = vpop.f32.mrb[0].mxu0
    %1054 = vdwg.mxu0
    %s1055 = scalar_lea.vmem [#allocation2], 2
    %v1056 = vld [vmem:[%s1055] ss:$8 sm:$0x7]
    %v1057 = vadd.f32 %v1056, %v1009
    %v1058 = vxor.u32 %v1057, 2147483648
    %v1059 = vmul.f32 %v1058, 1.442695
    %v1060 = vpow.pop %v1059
    %v1061 = vadd.f32 %v1060, 1.0
    %v1062 = vrcp.pop %v1061
    %v1063 = vmul.f32 1.0, %v1062
    %v1065 = vrot.slane %v1056, 1
    %v1067 = vadd.f32 %v1065, %v1011
    %v1068 = vxor.u32 %v1067, 2147483648
    %v1069 = vmul.f32 %v1068, 1.442695
    %v1070 = vpow.pop %v1069
    %v1071 = vadd.f32 %v1070, 1.0
    %v1072 = vrcp.pop %v1071
    %v1073 = vmul.f32 1.0, %v1072
    %v1074 = vmul.f32 %v1063, %v1050
    %v1075 = vrot.slane %v1056, 2
    %v1077 = vadd.f32 %v1075, %v1074
    %v1078 = vtanh.pop %v1077
    %v1079 = vsub.f32 1.0, %v1073
    %v1080 = vmul.f32 %v1079, %v1078
    %v1081 = vmul.f32 %v1073, %v795
    %v1082 = vadd.f32 %v1080, %v1081
    %1083 = vst [vmem:[#allocation3] sm:$0x1] %v1082
    %1084 = vst [vmem:[#allocation10 + $0x2] sm:$0x1] %v1082
    %v1085 = vld [vmem:[#allocation3] sm:$0x1]
    %v1086 = vpack.c.bf16 %v1085, %v1085
    %v1087 = vld [vmem:[#allocation9] sm:$0xff]
    %v1088 = vld [vmem:[#allocation9 + $0x8] sm:$0xf]
    %v1089 = vld [vmem:[#allocation9 + $0xc] sm:$0xff]
    %v1090 = vld [vmem:[#allocation9 + $0x14] sm:$0xf]
    %v1091 = vld [vmem:[#allocation9 + $0x18] sm:$0xff]
    %v1092 = vld [vmem:[#allocation9 + $0x20] sm:$0xf]
    %v1093 = vld [vmem:[#allocation9 + $0x24] sm:$0xff]
    %v1094 = vld [vmem:[#allocation9 + $0x2c] sm:$0xf]
    %v1095 = vld [vmem:[#allocation9 + $0x30] sm:$0xff]
    %v1096 = vld [vmem:[#allocation9 + $0x38] sm:$0xf]
    %v1097 = vld [vmem:[#allocation9 + $0x3c] sm:$0xff]
    %v1098 = vld [vmem:[#allocation9 + $0x44] sm:$0xf]
    %v1099 = vld [vmem:[#allocation9 + $0x48] sm:$0xff]
    %v1100 = vld [vmem:[#allocation9 + $0x50] sm:$0xf]
    %v1101 = vld [vmem:[#allocation9 + $0x54] sm:$0xff]
    %v1102 = vld [vmem:[#allocation9 + $0x5c] sm:$0xf]
    %v1103 = vld [vmem:[#allocation9 + $0x60] sm:$0xff]
    %v1104 = vld [vmem:[#allocation9 + $0x68] sm:$0xf]
    %v1105 = vld [vmem:[#allocation9 + $0x6c] sm:$0xff]
    %v1106 = vld [vmem:[#allocation9 + $0x74] sm:$0xf]
    %v1107 = vld [vmem:[#allocation9 + $0x78] sm:$0xff]
    %v1108 = vld [vmem:[#allocation9 + $0x80] sm:$0xf]
    %v1109 = vld [vmem:[#allocation9 + $0x84] sm:$0xff]
    %v1110 = vld [vmem:[#allocation9 + $0x8c] sm:$0xf]
    %v1111 = vld [vmem:[#allocation9 + $0x90] sm:$0xff]
    %v1112 = vld [vmem:[#allocation9 + $0x98] sm:$0xf]
    %v1113 = vld [vmem:[#allocation9 + $0x9c] sm:$0xff]
    %v1114 = vld [vmem:[#allocation9 + $0xa4] sm:$0xf]
    %v1115 = vld [vmem:[#allocation9 + $0xa8] sm:$0xff]
    %v1116 = vld [vmem:[#allocation9 + $0xb0] sm:$0xf]
    %v1117 = vld [vmem:[#allocation9 + $0xb4] sm:$0xff]
    %v1118 = vld [vmem:[#allocation9 + $0xbc] sm:$0xf]
    %v1119 = vld [vmem:[%s5] sm:$0x7]
    %v1152 = vunpack.c.l.b16 %v1087
    %v1153 = vunpack.c.h.b16 %v1087
    %v1154 = vunpack.c.l.b16 %v1088
    %v1155 = vunpack.c.l.b16 %v1089
    %v1156 = vunpack.c.h.b16 %v1089
    %v1157 = vunpack.c.l.b16 %v1090
    %v1158 = vunpack.c.l.b16 %v1091
    %v1159 = vunpack.c.h.b16 %v1091
    %v1160 = vunpack.c.l.b16 %v1092
    %v1161 = vunpack.c.l.b16 %v1093
    %v1162 = vunpack.c.h.b16 %v1093
    %v1163 = vunpack.c.l.b16 %v1094
    %v1164 = vunpack.c.l.b16 %v1095
    %v1165 = vunpack.c.h.b16 %v1095
    %v1166 = vunpack.c.l.b16 %v1096
    %v1167 = vunpack.c.l.b16 %v1097
    %v1168 = vunpack.c.h.b16 %v1097
    %v1169 = vunpack.c.l.b16 %v1098
    %v1170 = vunpack.c.l.b16 %v1099
    %v1171 = vunpack.c.h.b16 %v1099
    %v1172 = vunpack.c.l.b16 %v1100
    %v1173 = vunpack.c.l.b16 %v1101
    %v1174 = vunpack.c.h.b16 %v1101
    %v1175 = vunpack.c.l.b16 %v1102
    %v1176 = vunpack.c.l.b16 %v1103
    %v1177 = vunpack.c.h.b16 %v1103
    %v1178 = vunpack.c.l.b16 %v1104
    %v1179 = vunpack.c.l.b16 %v1105
    %v1180 = vunpack.c.h.b16 %v1105
    %v1181 = vunpack.c.l.b16 %v1106
    %v1182 = vunpack.c.l.b16 %v1107
    %v1183 = vunpack.c.h.b16 %v1107
    %v1184 = vunpack.c.l.b16 %v1108
    %v1185 = vunpack.c.l.b16 %v1109
    %v1186 = vunpack.c.h.b16 %v1109
    %v1187 = vunpack.c.l.b16 %v1110
    %v1188 = vunpack.c.l.b16 %v1111
    %v1189 = vunpack.c.h.b16 %v1111
    %v1190 = vunpack.c.l.b16 %v1112
    %v1191 = vunpack.c.l.b16 %v1113
    %v1192 = vunpack.c.h.b16 %v1113
    %v1193 = vunpack.c.l.b16 %v1114
    %v1194 = vunpack.c.l.b16 %v1115
    %v1195 = vunpack.c.h.b16 %v1115
    %v1196 = vunpack.c.l.b16 %v1116
    %v1197 = vunpack.c.l.b16 %v1117
    %v1198 = vunpack.c.h.b16 %v1117
    %v1199 = vunpack.c.l.b16 %v1118
    %v1200 = vpack.c.b16 %v1155, %v1152
    %v1201 = vpack.c.b16 %v1156, %v1153
    %v1202 = vpack.c.b16 %v1157, %v1154
    %v1203 = vpack.c.b16 %v1161, %v1158
    %v1204 = vpack.c.b16 %v1162, %v1159
    %v1205 = vpack.c.b16 %v1163, %v1160
    %v1206 = vpack.c.b16 %v1167, %v1164
    %v1207 = vpack.c.b16 %v1168, %v1165
    %v1208 = vpack.c.b16 %v1169, %v1166
    %v1209 = vpack.c.b16 %v1173, %v1170
    %v1210 = vpack.c.b16 %v1174, %v1171
    %v1211 = vpack.c.b16 %v1175, %v1172
    %v1212 = vpack.c.b16 %v1179, %v1176
    %v1213 = vpack.c.b16 %v1180, %v1177
    %v1214 = vpack.c.b16 %v1181, %v1178
    %v1215 = vpack.c.b16 %v1185, %v1182
    %v1216 = vpack.c.b16 %v1186, %v1183
    %v1217 = vpack.c.b16 %v1187, %v1184
    %v1218 = vpack.c.b16 %v1191, %v1188
    %v1219 = vpack.c.b16 %v1192, %v1189
    %v1220 = vpack.c.b16 %v1193, %v1190
    %v1221 = vpack.c.b16 %v1197, %v1194
    %v1222 = vpack.c.b16 %v1198, %v1195
    %v1223 = vpack.c.b16 %v1199, %v1196
    %v1249 = vlaneseq
    %v1250 = vshrl.u32 %v1249, 7
    %v1251 = vsub.s32 0, %v1250
    %v1252 = vrot.slane %v1119, %v1251
    %v1253 = vlaneseq
    %v1254 = vshrl.u32 %v1253, 7
    %v1255 = vsub.s32 1, %v1254
    %v1256 = vrot.slane %v1119, %v1255
    %v1257 = vlaneseq
    %v1258 = vshrl.u32 %v1257, 7
    %v1259 = vsub.s32 2, %v1258
    %v1260 = vrot.slane %v1119, %v1259
    %1264 = vmatprep.subr.bf16.mxu0 %v1201
    %1265 = vmatpush1.bf16.msra.mxu0 %v1200
    %1266 = vmatprep.subr.bf16.mxu0 %v1204
    %1267 = vmatpush1.bf16.msra.mxu0 %v1203
    %1268 = vmatprep.subr.bf16.mxu0 %v1207
    %1269 = vmatpush1.bf16.msra.mxu0 %v1206
    %1270 = vmatprep.subr.bf16.mxu0 %v1210
    %1271 = vmatpush1.bf16.msra.mxu0 %v1209
    %1272 = vmatprep.subr.bf16.mxu0 %v1213
    %1273 = vmatpush1.bf16.msra.mxu0 %v1212
    %1274 = vmatprep.subr.bf16.mxu0 %v1216
    %1275 = vmatpush1.bf16.msra.mxu0 %v1215
    %1276 = vmatprep.subr.bf16.mxu0 %v1219
    %1277 = vmatpush1.bf16.msra.mxu0 %v1218
    %1278 = vmatprep.subr.bf16.mxu0 %v1222
    %1279 = vmatpush1.bf16.msra.mxu0 %v1221
    %1280 = vmatprep.subr.bf16.mxu0 0
    %1281 = vmatpush1.bf16.msra.mxu0 0
    %1282 = vmatprep.subr.bf16.mxu0 0
    %1283 = vmatpush1.bf16.msra.mxu0 0
    %1284 = vmatprep.subr.bf16.mxu0 0
    %1285 = vmatpush1.bf16.msra.mxu0 0
    %1286 = vmatprep.subr.bf16.mxu0 0
    %1287 = vmatpush1.bf16.msra.mxu0 0
    %1288 = vmatprep.subr.bf16.mxu0 0
    %1289 = vmatpush1.bf16.msra.mxu0 0
    %1290 = vmatprep.subr.bf16.mxu0 0
    %1291 = vmatpush1.bf16.msra.mxu0 0
    %1292 = vmatprep.subr.bf16.mxu0 0
    %1293 = vmatpush1.bf16.msra.mxu0 0
    %1294 = vmatprep.subr.bf16.mxu0 0
    %1295 = vmatpush1.bf16.msra.mxu0 0
    %1296 = vmatprep.mubr.bf16.mxu0 0
    %1297 = vmatmul.mubr.bf16.gmra.mrb[0].mxu0 %v1086
    %v1298 = vpop.f32.mrb[0].mxu0
    %v1299 = vadd.f32 %v1252, %v1298
    %v1300 = vpop.f32.mrb[0].mxu0
    %v1301 = vadd.f32 %v1256, %v1300
    %v1302 = vpop.f32.mrb[0].mxu0
    %v1303 = vpop.f32.mrb[0].mxu0
    %1304 = vdwg.mxu0
    %1305 = vmatprep.subr.bf16.mxu0 0
    %1306 = vmatpush1.bf16.msra.mxu0 %v1202
    %1307 = vmatprep.subr.bf16.mxu0 0
    %1308 = vmatpush1.bf16.msra.mxu0 %v1205
    %1309 = vmatprep.subr.bf16.mxu0 0
    %1310 = vmatpush1.bf16.msra.mxu0 %v1208
    %1311 = vmatprep.subr.bf16.mxu0 0
    %1312 = vmatpush1.bf16.msra.mxu0 %v1211
    %1313 = vmatprep.subr.bf16.mxu0 0
    %1314 = vmatpush1.bf16.msra.mxu0 %v1214
    %1315 = vmatprep.subr.bf16.mxu0 0
    %1316 = vmatpush1.bf16.msra.mxu0 %v1217
    %1317 = vmatprep.subr.bf16.mxu0 0
    %1318 = vmatpush1.bf16.msra.mxu0 %v1220
    %1319 = vmatprep.subr.bf16.mxu0 0
    %1320 = vmatpush1.bf16.msra.mxu0 %v1223
    %1321 = vmatprep.subr.bf16.mxu0 0
    %1322 = vmatpush1.bf16.msra.mxu0 0
    %1323 = vmatprep.subr.bf16.mxu0 0
    %1324 = vmatpush1.bf16.msra.mxu0 0
    %1325 = vmatprep.subr.bf16.mxu0 0
    %1326 = vmatpush1.bf16.msra.mxu0 0
    %1327 = vmatprep.subr.bf16.mxu0 0
    %1328 = vmatpush1.bf16.msra.mxu0 0
    %1329 = vmatprep.subr.bf16.mxu0 0
    %1330 = vmatpush1.bf16.msra.mxu0 0
    %1331 = vmatprep.subr.bf16.mxu0 0
    %1332 = vmatpush1.bf16.msra.mxu0 0
    %1333 = vmatprep.subr.bf16.mxu0 0
    %1334 = vmatpush1.bf16.msra.mxu0 0
    %1335 = vmatprep.subr.bf16.mxu0 0
    %1336 = vmatpush1.bf16.msra.mxu0 0
    %1337 = vmatprep.mubr.bf16.mxu0 0
    %1338 = vmatmul.mubr.bf16.gmra.mrb[0].mxu0 %v1086
    %v1339 = vpop.f32.mrb[0].mxu0
    %v1340 = vadd.f32 %v1260, %v1339
    %v1341 = vpop.f32.mrb[0].mxu0
    %v1342 = vpop.f32.mrb[0].mxu0
    %v1343 = vpop.f32.mrb[0].mxu0
    %1344 = vdwg.mxu0
    %s1345 = scalar_lea.vmem [#allocation2], 3
    %v1346 = vld [vmem:[%s1345] ss:$8 sm:$0x7]
    %v1347 = vadd.f32 %v1346, %v1299
    %v1348 = vxor.u32 %v1347, 2147483648
    %v1349 = vmul.f32 %v1348, 1.442695
    %v1350 = vpow.pop %v1349
    %v1351 = vadd.f32 %v1350, 1.0
    %v1352 = vrcp.pop %v1351
    %v1353 = vmul.f32 1.0, %v1352
    %v1355 = vrot.slane %v1346, 1
    %v1357 = vadd.f32 %v1355, %v1301
    %v1358 = vxor.u32 %v1357, 2147483648
    %v1359 = vmul.f32 %v1358, 1.442695
    %v1360 = vpow.pop %v1359
    %v1361 = vadd.f32 %v1360, 1.0
    %v1362 = vrcp.pop %v1361
    %v1363 = vmul.f32 1.0, %v1362
    %v1364 = vmul.f32 %v1353, %v1340
    %v1365 = vrot.slane %v1346, 2
    %v1367 = vadd.f32 %v1365, %v1364
    %v1368 = vtanh.pop %v1367
    %v1369 = vsub.f32 1.0, %v1363
    %v1370 = vmul.f32 %v1369, %v1368
    %v1371 = vmul.f32 %v1363, %v1085
    %v1372 = vadd.f32 %v1370, %v1371
    %1373 = vst [vmem:[#allocation3] sm:$0x1] %v1372
    %1374 = vst [vmem:[#allocation10 + $0x3] sm:$0x1] %v1372
    %v1375 = vld [vmem:[#allocation3] sm:$0x1]
    %v1376 = vpack.c.bf16 %v1375, %v1375
    %v1377 = vld [vmem:[#allocation9] sm:$0xff]
    %v1378 = vld [vmem:[#allocation9 + $0x8] sm:$0xf]
    %v1379 = vld [vmem:[#allocation9 + $0xc] sm:$0xff]
    %v1380 = vld [vmem:[#allocation9 + $0x14] sm:$0xf]
    %v1381 = vld [vmem:[#allocation9 + $0x18] sm:$0xff]
    %v1382 = vld [vmem:[#allocation9 + $0x20] sm:$0xf]
    %v1383 = vld [vmem:[#allocation9 + $0x24] sm:$0xff]
    %v1384 = vld [vmem:[#allocation9 + $0x2c] sm:$0xf]
    %v1385 = vld [vmem:[#allocation9 + $0x30] sm:$0xff]
    %v1386 = vld [vmem:[#allocation9 + $0x38] sm:$0xf]
    %v1387 = vld [vmem:[#allocation9 + $0x3c] sm:$0xff]
    %v1388 = vld [vmem:[#allocation9 + $0x44] sm:$0xf]
    %v1389 = vld [vmem:[#allocation9 + $0x48] sm:$0xff]
    %v1390 = vld [vmem:[#allocation9 + $0x50] sm:$0xf]
    %v1391 = vld [vmem:[#allocation9 + $0x54] sm:$0xff]
    %v1392 = vld [vmem:[#allocation9 + $0x5c] sm:$0xf]
    %v1393 = vld [vmem:[#allocation9 + $0x60] sm:$0xff]
    %v1394 = vld [vmem:[#allocation9 + $0x68] sm:$0xf]
    %v1395 = vld [vmem:[#allocation9 + $0x6c] sm:$0xff]
    %v1396 = vld [vmem:[#allocation9 + $0x74] sm:$0xf]
    %v1397 = vld [vmem:[#allocation9 + $0x78] sm:$0xff]
    %v1398 = vld [vmem:[#allocation9 + $0x80] sm:$0xf]
    %v1399 = vld [vmem:[#allocation9 + $0x84] sm:$0xff]
    %v1400 = vld [vmem:[#allocation9 + $0x8c] sm:$0xf]
    %v1401 = vld [vmem:[#allocation9 + $0x90] sm:$0xff]
    %v1402 = vld [vmem:[#allocation9 + $0x98] sm:$0xf]
    %v1403 = vld [vmem:[#allocation9 + $0x9c] sm:$0xff]
    %v1404 = vld [vmem:[#allocation9 + $0xa4] sm:$0xf]
    %v1405 = vld [vmem:[#allocation9 + $0xa8] sm:$0xff]
    %v1406 = vld [vmem:[#allocation9 + $0xb0] sm:$0xf]
    %v1407 = vld [vmem:[#allocation9 + $0xb4] sm:$0xff]
    %v1408 = vld [vmem:[#allocation9 + $0xbc] sm:$0xf]
    %v1409 = vld [vmem:[%s5] sm:$0x7]
    %v1442 = vunpack.c.l.b16 %v1377
    %v1443 = vunpack.c.h.b16 %v1377
    %v1444 = vunpack.c.l.b16 %v1378
    %v1445 = vunpack.c.l.b16 %v1379
    %v1446 = vunpack.c.h.b16 %v1379
    %v1447 = vunpack.c.l.b16 %v1380
    %v1448 = vunpack.c.l.b16 %v1381
    %v1449 = vunpack.c.h.b16 %v1381
    %v1450 = vunpack.c.l.b16 %v1382
    %v1451 = vunpack.c.l.b16 %v1383
    %v1452 = vunpack.c.h.b16 %v1383
    %v1453 = vunpack.c.l.b16 %v1384
    %v1454 = vunpack.c.l.b16 %v1385
    %v1455 = vunpack.c.h.b16 %v1385
    %v1456 = vunpack.c.l.b16 %v1386
    %v1457 = vunpack.c.l.b16 %v1387
    %v1458 = vunpack.c.h.b16 %v1387
    %v1459 = vunpack.c.l.b16 %v1388
    %v1460 = vunpack.c.l.b16 %v1389
    %v1461 = vunpack.c.h.b16 %v1389
    %v1462 = vunpack.c.l.b16 %v1390
    %v1463 = vunpack.c.l.b16 %v1391
    %v1464 = vunpack.c.h.b16 %v1391
    %v1465 = vunpack.c.l.b16 %v1392
    %v1466 = vunpack.c.l.b16 %v1393
    %v1467 = vunpack.c.h.b16 %v1393
    %v1468 = vunpack.c.l.b16 %v1394
    %v1469 = vunpack.c.l.b16 %v1395
    %v1470 = vunpack.c.h.b16 %v1395
    %v1471 = vunpack.c.l.b16 %v1396
    %v1472 = vunpack.c.l.b16 %v1397
    %v1473 = vunpack.c.h.b16 %v1397
    %v1474 = vunpack.c.l.b16 %v1398
    %v1475 = vunpack.c.l.b16 %v1399
    %v1476 = vunpack.c.h.b16 %v1399
    %v1477 = vunpack.c.l.b16 %v1400
    %v1478 = vunpack.c.l.b16 %v1401
    %v1479 = vunpack.c.h.b16 %v1401
    %v1480 = vunpack.c.l.b16 %v1402
    %v1481 = vunpack.c.l.b16 %v1403
    %v1482 = vunpack.c.h.b16 %v1403
    %v1483 = vunpack.c.l.b16 %v1404
    %v1484 = vunpack.c.l.b16 %v1405
    %v1485 = vunpack.c.h.b16 %v1405
    %v1486 = vunpack.c.l.b16 %v1406
    %v1487 = vunpack.c.l.b16 %v1407
    %v1488 = vunpack.c.h.b16 %v1407
    %v1489 = vunpack.c.l.b16 %v1408
    %v1490 = vpack.c.b16 %v1445, %v1442
    %v1491 = vpack.c.b16 %v1446, %v1443
    %v1492 = vpack.c.b16 %v1447, %v1444
    %v1493 = vpack.c.b16 %v1451, %v1448
    %v1494 = vpack.c.b16 %v1452, %v1449
    %v1495 = vpack.c.b16 %v1453, %v1450
    %v1496 = vpack.c.b16 %v1457, %v1454
    %v1497 = vpack.c.b16 %v1458, %v1455
    %v1498 = vpack.c.b16 %v1459, %v1456
    %v1499 = vpack.c.b16 %v1463, %v1460
    %v1500 = vpack.c.b16 %v1464, %v1461
    %v1501 = vpack.c.b16 %v1465, %v1462
    %v1502 = vpack.c.b16 %v1469, %v1466
    %v1503 = vpack.c.b16 %v1470, %v1467
    %v1504 = vpack.c.b16 %v1471, %v1468
    %v1505 = vpack.c.b16 %v1475, %v1472
    %v1506 = vpack.c.b16 %v1476, %v1473
    %v1507 = vpack.c.b16 %v1477, %v1474
    %v1508 = vpack.c.b16 %v1481, %v1478
    %v1509 = vpack.c.b16 %v1482, %v1479
    %v1510 = vpack.c.b16 %v1483, %v1480
    %v1511 = vpack.c.b16 %v1487, %v1484
    %v1512 = vpack.c.b16 %v1488, %v1485
    %v1513 = vpack.c.b16 %v1489, %v1486
    %v1539 = vlaneseq
    %v1540 = vshrl.u32 %v1539, 7
    %v1541 = vsub.s32 0, %v1540
    %v1542 = vrot.slane %v1409, %v1541
    %v1543 = vlaneseq
    %v1544 = vshrl.u32 %v1543, 7
    %v1545 = vsub.s32 1, %v1544
    %v1546 = vrot.slane %v1409, %v1545
    %v1547 = vlaneseq
    %v1548 = vshrl.u32 %v1547, 7
    %v1549 = vsub.s32 2, %v1548
    %v1550 = vrot.slane %v1409, %v1549
    %1554 = vmatprep.subr.bf16.mxu0 %v1491
    %1555 = vmatpush1.bf16.msra.mxu0 %v1490
    %1556 = vmatprep.subr.bf16.mxu0 %v1494
    %1557 = vmatpush1.bf16.msra.mxu0 %v1493
    %1558 = vmatprep.subr.bf16.mxu0 %v1497
    %1559 = vmatpush1.bf16.msra.mxu0 %v1496
    %1560 = vmatprep.subr.bf16.mxu0 %v1500
    %1561 = vmatpush1.bf16.msra.mxu0 %v1499
    %1562 = vmatprep.subr.bf16.mxu0 %v1503
    %1563 = vmatpush1.bf16.msra.mxu0 %v1502
    %1564 = vmatprep.subr.bf16.mxu0 %v1506
    %1565 = vmatpush1.bf16.msra.mxu0 %v1505
    %1566 = vmatprep.subr.bf16.mxu0 %v1509
    %1567 = vmatpush1.bf16.msra.mxu0 %v1508
    %1568 = vmatprep.subr.bf16.mxu0 %v1512
    %1569 = vmatpush1.bf16.msra.mxu0 %v1511
    %1570 = vmatprep.subr.bf16.mxu0 0
    %1571 = vmatpush1.bf16.msra.mxu0 0
    %1572 = vmatprep.subr.bf16.mxu0 0
    %1573 = vmatpush1.bf16.msra.mxu0 0
    %1574 = vmatprep.subr.bf16.mxu0 0
    %1575 = vmatpush1.bf16.msra.mxu0 0
    %1576 = vmatprep.subr.bf16.mxu0 0
    %1577 = vmatpush1.bf16.msra.mxu0 0
    %1578 = vmatprep.subr.bf16.mxu0 0
    %1579 = vmatpush1.bf16.msra.mxu0 0
    %1580 = vmatprep.subr.bf16.mxu0 0
    %1581 = vmatpush1.bf16.msra.mxu0 0
    %1582 = vmatprep.subr.bf16.mxu0 0
    %1583 = vmatpush1.bf16.msra.mxu0 0
    %1584 = vmatprep.subr.bf16.mxu0 0
    %1585 = vmatpush1.bf16.msra.mxu0 0
    %1586 = vmatprep.mubr.bf16.mxu0 0
    %1587 = vmatmul.mubr.bf16.gmra.mrb[0].mxu0 %v1376
    %v1588 = vpop.f32.mrb[0].mxu0
    %v1589 = vadd.f32 %v1542, %v1588
    %v1590 = vpop.f32.mrb[0].mxu0
    %v1591 = vadd.f32 %v1546, %v1590
    %v1592 = vpop.f32.mrb[0].mxu0
    %v1593 = vpop.f32.mrb[0].mxu0
    %1594 = vdwg.mxu0
    %1595 = vmatprep.subr.bf16.mxu0 0
    %1596 = vmatpush1.bf16.msra.mxu0 %v1492
    %1597 = vmatprep.subr.bf16.mxu0 0
    %1598 = vmatpush1.bf16.msra.mxu0 %v1495
    %1599 = vmatprep.subr.bf16.mxu0 0
    %1600 = vmatpush1.bf16.msra.mxu0 %v1498
    %1601 = vmatprep.subr.bf16.mxu0 0
    %1602 = vmatpush1.bf16.msra.mxu0 %v1501
    %1603 = vmatprep.subr.bf16.mxu0 0
    %1604 = vmatpush1.bf16.msra.mxu0 %v1504
    %1605 = vmatprep.subr.bf16.mxu0 0
    %1606 = vmatpush1.bf16.msra.mxu0 %v1507
    %1607 = vmatprep.subr.bf16.mxu0 0
    %1608 = vmatpush1.bf16.msra.mxu0 %v1510
    %1609 = vmatprep.subr.bf16.mxu0 0
    %1610 = vmatpush1.bf16.msra.mxu0 %v1513
    %1611 = vmatprep.subr.bf16.mxu0 0
    %1612 = vmatpush1.bf16.msra.mxu0 0
    %1613 = vmatprep.subr.bf16.mxu0 0
    %1614 = vmatpush1.bf16.msra.mxu0 0
    %1615 = vmatprep.subr.bf16.mxu0 0
    %1616 = vmatpush1.bf16.msra.mxu0 0
    %1617 = vmatprep.subr.bf16.mxu0 0
    %1618 = vmatpush1.bf16.msra.mxu0 0
    %1619 = vmatprep.subr.bf16.mxu0 0
    %1620 = vmatpush1.bf16.msra.mxu0 0
    %1621 = vmatprep.subr.bf16.mxu0 0
    %1622 = vmatpush1.bf16.msra.mxu0 0
    %1623 = vmatprep.subr.bf16.mxu0 0
    %1624 = vmatpush1.bf16.msra.mxu0 0
    %1625 = vmatprep.subr.bf16.mxu0 0
    %1626 = vmatpush1.bf16.msra.mxu0 0
    %1627 = vmatprep.mubr.bf16.mxu0 0
    %1628 = vmatmul.mubr.bf16.gmra.mrb[0].mxu0 %v1376
    %v1629 = vpop.f32.mrb[0].mxu0
    %v1630 = vadd.f32 %v1550, %v1629
    %v1631 = vpop.f32.mrb[0].mxu0
    %v1632 = vpop.f32.mrb[0].mxu0
    %v1633 = vpop.f32.mrb[0].mxu0
    %1634 = vdwg.mxu0
    %s1635 = scalar_lea.vmem [#allocation2], 4
    %v1636 = vld [vmem:[%s1635] ss:$8 sm:$0x7]
    %v1637 = vadd.f32 %v1636, %v1589
    %v1638 = vxor.u32 %v1637, 2147483648
    %v1639 = vmul.f32 %v1638, 1.442695
    %v1640 = vpow.pop %v1639
    %v1641 = vadd.f32 %v1640, 1.0
    %v1642 = vrcp.pop %v1641
    %v1643 = vmul.f32 1.0, %v1642
    %v1645 = vrot.slane %v1636, 1
    %v1647 = vadd.f32 %v1645, %v1591
    %v1648 = vxor.u32 %v1647, 2147483648
    %v1649 = vmul.f32 %v1648, 1.442695
    %v1650 = vpow.pop %v1649
    %v1651 = vadd.f32 %v1650, 1.0
    %v1652 = vrcp.pop %v1651
    %v1653 = vmul.f32 1.0, %v1652
    %v1654 = vmul.f32 %v1643, %v1630
    %v1655 = vrot.slane %v1636, 2
    %v1657 = vadd.f32 %v1655, %v1654
    %v1658 = vtanh.pop %v1657
    %v1659 = vsub.f32 1.0, %v1653
    %v1660 = vmul.f32 %v1659, %v1658
    %v1661 = vmul.f32 %v1653, %v1375
    %v1662 = vadd.f32 %v1660, %v1661
    %1663 = vst [vmem:[#allocation3] sm:$0x1] %v1662
    %1664 = vst [vmem:[#allocation10 + $0x4] sm:$0x1] %v1662
    %v1665 = vld [vmem:[#allocation3] sm:$0x1]
    %v1666 = vpack.c.bf16 %v1665, %v1665
    %v1667 = vld [vmem:[#allocation9] sm:$0xff]
    %v1668 = vld [vmem:[#allocation9 + $0x8] sm:$0xf]
    %v1669 = vld [vmem:[#allocation9 + $0xc] sm:$0xff]
    %v1670 = vld [vmem:[#allocation9 + $0x14] sm:$0xf]
    %v1671 = vld [vmem:[#allocation9 + $0x18] sm:$0xff]
    %v1672 = vld [vmem:[#allocation9 + $0x20] sm:$0xf]
    %v1673 = vld [vmem:[#allocation9 + $0x24] sm:$0xff]
    %v1674 = vld [vmem:[#allocation9 + $0x2c] sm:$0xf]
    %v1675 = vld [vmem:[#allocation9 + $0x30] sm:$0xff]
    %v1676 = vld [vmem:[#allocation9 + $0x38] sm:$0xf]
    %v1677 = vld [vmem:[#allocation9 + $0x3c] sm:$0xff]
    %v1678 = vld [vmem:[#allocation9 + $0x44] sm:$0xf]
    %v1679 = vld [vmem:[#allocation9 + $0x48] sm:$0xff]
    %v1680 = vld [vmem:[#allocation9 + $0x50] sm:$0xf]
    %v1681 = vld [vmem:[#allocation9 + $0x54] sm:$0xff]
    %v1682 = vld [vmem:[#allocation9 + $0x5c] sm:$0xf]
    %v1683 = vld [vmem:[#allocation9 + $0x60] sm:$0xff]
    %v1684 = vld [vmem:[#allocation9 + $0x68] sm:$0xf]
    %v1685 = vld [vmem:[#allocation9 + $0x6c] sm:$0xff]
    %v1686 = vld [vmem:[#allocation9 + $0x74] sm:$0xf]
    %v1687 = vld [vmem:[#allocation9 + $0x78] sm:$0xff]
    %v1688 = vld [vmem:[#allocation9 + $0x80] sm:$0xf]
    %v1689 = vld [vmem:[#allocation9 + $0x84] sm:$0xff]
    %v1690 = vld [vmem:[#allocation9 + $0x8c] sm:$0xf]
    %v1691 = vld [vmem:[#allocation9 + $0x90] sm:$0xff]
    %v1692 = vld [vmem:[#allocation9 + $0x98] sm:$0xf]
    %v1693 = vld [vmem:[#allocation9 + $0x9c] sm:$0xff]
    %v1694 = vld [vmem:[#allocation9 + $0xa4] sm:$0xf]
    %v1695 = vld [vmem:[#allocation9 + $0xa8] sm:$0xff]
    %v1696 = vld [vmem:[#allocation9 + $0xb0] sm:$0xf]
    %v1697 = vld [vmem:[#allocation9 + $0xb4] sm:$0xff]
    %v1698 = vld [vmem:[#allocation9 + $0xbc] sm:$0xf]
    %v1699 = vld [vmem:[%s5] sm:$0x7]
    %v1732 = vunpack.c.l.b16 %v1667
    %v1733 = vunpack.c.h.b16 %v1667
    %v1734 = vunpack.c.l.b16 %v1668
    %v1735 = vunpack.c.l.b16 %v1669
    %v1736 = vunpack.c.h.b16 %v1669
    %v1737 = vunpack.c.l.b16 %v1670
    %v1738 = vunpack.c.l.b16 %v1671
    %v1739 = vunpack.c.h.b16 %v1671
    %v1740 = vunpack.c.l.b16 %v1672
    %v1741 = vunpack.c.l.b16 %v1673
    %v1742 = vunpack.c.h.b16 %v1673
    %v1743 = vunpack.c.l.b16 %v1674
    %v1744 = vunpack.c.l.b16 %v1675
    %v1745 = vunpack.c.h.b16 %v1675
    %v1746 = vunpack.c.l.b16 %v1676
    %v1747 = vunpack.c.l.b16 %v1677
    %v1748 = vunpack.c.h.b16 %v1677
    %v1749 = vunpack.c.l.b16 %v1678
    %v1750 = vunpack.c.l.b16 %v1679
    %v1751 = vunpack.c.h.b16 %v1679
    %v1752 = vunpack.c.l.b16 %v1680
    %v1753 = vunpack.c.l.b16 %v1681
    %v1754 = vunpack.c.h.b16 %v1681
    %v1755 = vunpack.c.l.b16 %v1682
    %v1756 = vunpack.c.l.b16 %v1683
    %v1757 = vunpack.c.h.b16 %v1683
    %v1758 = vunpack.c.l.b16 %v1684
    %v1759 = vunpack.c.l.b16 %v1685
    %v1760 = vunpack.c.h.b16 %v1685
    %v1761 = vunpack.c.l.b16 %v1686
    %v1762 = vunpack.c.l.b16 %v1687
    %v1763 = vunpack.c.h.b16 %v1687
    %v1764 = vunpack.c.l.b16 %v1688
    %v1765 = vunpack.c.l.b16 %v1689
    %v1766 = vunpack.c.h.b16 %v1689
    %v1767 = vunpack.c.l.b16 %v1690
    %v1768 = vunpack.c.l.b16 %v1691
    %v1769 = vunpack.c.h.b16 %v1691
    %v1770 = vunpack.c.l.b16 %v1692
    %v1771 = vunpack.c.l.b16 %v1693
    %v1772 = vunpack.c.h.b16 %v1693
    %v1773 = vunpack.c.l.b16 %v1694
    %v1774 = vunpack.c.l.b16 %v1695
    %v1775 = vunpack.c.h.b16 %v1695
    %v1776 = vunpack.c.l.b16 %v1696
    %v1777 = vunpack.c.l.b16 %v1697
    %v1778 = vunpack.c.h.b16 %v1697
    %v1779 = vunpack.c.l.b16 %v1698
    %v1780 = vpack.c.b16 %v1735, %v1732
    %v1781 = vpack.c.b16 %v1736, %v1733
    %v1782 = vpack.c.b16 %v1737, %v1734
    %v1783 = vpack.c.b16 %v1741, %v1738
    %v1784 = vpack.c.b16 %v1742, %v1739
    %v1785 = vpack.c.b16 %v1743, %v1740
    %v1786 = vpack.c.b16 %v1747, %v1744
    %v1787 = vpack.c.b16 %v1748, %v1745
    %v1788 = vpack.c.b16 %v1749, %v1746
    %v1789 = vpack.c.b16 %v1753, %v1750
    %v1790 = vpack.c.b16 %v1754, %v1751
    %v1791 = vpack.c.b16 %v1755, %v1752
    %v1792 = vpack.c.b16 %v1759, %v1756
    %v1793 = vpack.c.b16 %v1760, %v1757
    %v1794 = vpack.c.b16 %v1761, %v1758
    %v1795 = vpack.c.b16 %v1765, %v1762
    %v1796 = vpack.c.b16 %v1766, %v1763
    %v1797 = vpack.c.b16 %v1767, %v1764
    %v1798 = vpack.c.b16 %v1771, %v1768
    %v1799 = vpack.c.b16 %v1772, %v1769
    %v1800 = vpack.c.b16 %v1773, %v1770
    %v1801 = vpack.c.b16 %v1777, %v1774
    %v1802 = vpack.c.b16 %v1778, %v1775
    %v1803 = vpack.c.b16 %v1779, %v1776
    %v1829 = vlaneseq
    %v1830 = vshrl.u32 %v1829, 7
    %v1831 = vsub.s32 0, %v1830
    %v1832 = vrot.slane %v1699, %v1831
    %v1833 = vlaneseq
    %v1834 = vshrl.u32 %v1833, 7
    %v1835 = vsub.s32 1, %v1834
    %v1836 = vrot.slane %v1699, %v1835
    %v1837 = vlaneseq
    %v1838 = vshrl.u32 %v1837, 7
    %v1839 = vsub.s32 2, %v1838
    %v1840 = vrot.slane %v1699, %v1839
    %1844 = vmatprep.subr.bf16.mxu0 %v1781
    %1845 = vmatpush1.bf16.msra.mxu0 %v1780
    %1846 = vmatprep.subr.bf16.mxu0 %v1784
    %1847 = vmatpush1.bf16.msra.mxu0 %v1783
    %1848 = vmatprep.subr.bf16.mxu0 %v1787
    %1849 = vmatpush1.bf16.msra.mxu0 %v1786
    %1850 = vmatprep.subr.bf16.mxu0 %v1790
    %1851 = vmatpush1.bf16.msra.mxu0 %v1789
    %1852 = vmatprep.subr.bf16.mxu0 %v1793
    %1853 = vmatpush1.bf16.msra.mxu0 %v1792
    %1854 = vmatprep.subr.bf16.mxu0 %v1796
    %1855 = vmatpush1.bf16.msra.mxu0 %v1795
    %1856 = vmatprep.subr.bf16.mxu0 %v1799
    %1857 = vmatpush1.bf16.msra.mxu0 %v1798
    %1858 = vmatprep.subr.bf16.mxu0 %v1802
    %1859 = vmatpush1.bf16.msra.mxu0 %v1801
    %1860 = vmatprep.subr.bf16.mxu0 0
    %1861 = vmatpush1.bf16.msra.mxu0 0
    %1862 = vmatprep.subr.bf16.mxu0 0
    %1863 = vmatpush1.bf16.msra.mxu0 0
    %1864 = vmatprep.subr.bf16.mxu0 0
    %1865 = vmatpush1.bf16.msra.mxu0 0
    %1866 = vmatprep.subr.bf16.mxu0 0
    %1867 = vmatpush1.bf16.msra.mxu0 0
    %1868 = vmatprep.subr.bf16.mxu0 0
    %1869 = vmatpush1.bf16.msra.mxu0 0
    %1870 = vmatprep.subr.bf16.mxu0 0
    %1871 = vmatpush1.bf16.msra.mxu0 0
    %1872 = vmatprep.subr.bf16.mxu0 0
    %1873 = vmatpush1.bf16.msra.mxu0 0
    %1874 = vmatprep.subr.bf16.mxu0 0
    %1875 = vmatpush1.bf16.msra.mxu0 0
    %1876 = vmatprep.mubr.bf16.mxu0 0
    %1877 = vmatmul.mubr.bf16.gmra.mrb[0].mxu0 %v1666
    %v1878 = vpop.f32.mrb[0].mxu0
    %v1879 = vadd.f32 %v1832, %v1878
    %v1880 = vpop.f32.mrb[0].mxu0
    %v1881 = vadd.f32 %v1836, %v1880
    %v1882 = vpop.f32.mrb[0].mxu0
    %v1883 = vpop.f32.mrb[0].mxu0
    %1884 = vdwg.mxu0
    %1885 = vmatprep.subr.bf16.mxu0 0
    %1886 = vmatpush1.bf16.msra.mxu0 %v1782
    %1887 = vmatprep.subr.bf16.mxu0 0
    %1888 = vmatpush1.bf16.msra.mxu0 %v1785
    %1889 = vmatprep.subr.bf16.mxu0 0
    %1890 = vmatpush1.bf16.msra.mxu0 %v1788
    %1891 = vmatprep.subr.bf16.mxu0 0
    %1892 = vmatpush1.bf16.msra.mxu0 %v1791
    %1893 = vmatprep.subr.bf16.mxu0 0
    %1894 = vmatpush1.bf16.msra.mxu0 %v1794
    %1895 = vmatprep.subr.bf16.mxu0 0
    %1896 = vmatpush1.bf16.msra.mxu0 %v1797
    %1897 = vmatprep.subr.bf16.mxu0 0
    %1898 = vmatpush1.bf16.msra.mxu0 %v1800
    %1899 = vmatprep.subr.bf16.mxu0 0
    %1900 = vmatpush1.bf16.msra.mxu0 %v1803
    %1901 = vmatprep.subr.bf16.mxu0 0
    %1902 = vmatpush1.bf16.msra.mxu0 0
    %1903 = vmatprep.subr.bf16.mxu0 0
    %1904 = vmatpush1.bf16.msra.mxu0 0
    %1905 = vmatprep.subr.bf16.mxu0 0
    %1906 = vmatpush1.bf16.msra.mxu0 0
    %1907 = vmatprep.subr.bf16.mxu0 0
    %1908 = vmatpush1.bf16.msra.mxu0 0
    %1909 = vmatprep.subr.bf16.mxu0 0
    %1910 = vmatpush1.bf16.msra.mxu0 0
    %1911 = vmatprep.subr.bf16.mxu0 0
    %1912 = vmatpush1.bf16.msra.mxu0 0
    %1913 = vmatprep.subr.bf16.mxu0 0
    %1914 = vmatpush1.bf16.msra.mxu0 0
    %1915 = vmatprep.subr.bf16.mxu0 0
    %1916 = vmatpush1.bf16.msra.mxu0 0
    %1917 = vmatprep.mubr.bf16.mxu0 0
    %1918 = vmatmul.mubr.bf16.gmra.mrb[0].mxu0 %v1666
    %v1919 = vpop.f32.mrb[0].mxu0
    %v1920 = vadd.f32 %v1840, %v1919
    %v1921 = vpop.f32.mrb[0].mxu0
    %v1922 = vpop.f32.mrb[0].mxu0
    %v1923 = vpop.f32.mrb[0].mxu0
    %1924 = vdwg.mxu0
    %s1925 = scalar_lea.vmem [#allocation2], 5
    %v1926 = vld [vmem:[%s1925] ss:$8 sm:$0x7]
    %v1927 = vadd.f32 %v1926, %v1879
    %v1928 = vxor.u32 %v1927, 2147483648
    %v1929 = vmul.f32 %v1928, 1.442695
    %v1930 = vpow.pop %v1929
    %v1931 = vadd.f32 %v1930, 1.0
    %v1932 = vrcp.pop %v1931
    %v1933 = vmul.f32 1.0, %v1932
    %v1935 = vrot.slane %v1926, 1
    %v1937 = vadd.f32 %v1935, %v1881
    %v1938 = vxor.u32 %v1937, 2147483648
    %v1939 = vmul.f32 %v1938, 1.442695
    %v1940 = vpow.pop %v1939
    %v1941 = vadd.f32 %v1940, 1.0
    %v1942 = vrcp.pop %v1941
    %v1943 = vmul.f32 1.0, %v1942
    %v1944 = vmul.f32 %v1933, %v1920
    %v1945 = vrot.slane %v1926, 2
    %v1947 = vadd.f32 %v1945, %v1944
    %v1948 = vtanh.pop %v1947
    %v1949 = vsub.f32 1.0, %v1943
    %v1950 = vmul.f32 %v1949, %v1948
    %v1951 = vmul.f32 %v1943, %v1665
    %v1952 = vadd.f32 %v1950, %v1951
    %1953 = vst [vmem:[#allocation3] sm:$0x1] %v1952
    %1954 = vst [vmem:[#allocation10 + $0x5] sm:$0x1] %v1952
    %v1955 = vld [vmem:[#allocation3] sm:$0x1]
    %v1956 = vpack.c.bf16 %v1955, %v1955
    %v1957 = vld [vmem:[#allocation9] sm:$0xff]
    %v1958 = vld [vmem:[#allocation9 + $0x8] sm:$0xf]
    %v1959 = vld [vmem:[#allocation9 + $0xc] sm:$0xff]
    %v1960 = vld [vmem:[#allocation9 + $0x14] sm:$0xf]
    %v1961 = vld [vmem:[#allocation9 + $0x18] sm:$0xff]
    %v1962 = vld [vmem:[#allocation9 + $0x20] sm:$0xf]
    %v1963 = vld [vmem:[#allocation9 + $0x24] sm:$0xff]
    %v1964 = vld [vmem:[#allocation9 + $0x2c] sm:$0xf]
    %v1965 = vld [vmem:[#allocation9 + $0x30] sm:$0xff]
    %v1966 = vld [vmem:[#allocation9 + $0x38] sm:$0xf]
    %v1967 = vld [vmem:[#allocation9 + $0x3c] sm:$0xff]
    %v1968 = vld [vmem:[#allocation9 + $0x44] sm:$0xf]
    %v1969 = vld [vmem:[#allocation9 + $0x48] sm:$0xff]
    %v1970 = vld [vmem:[#allocation9 + $0x50] sm:$0xf]
    %v1971 = vld [vmem:[#allocation9 + $0x54] sm:$0xff]
    %v1972 = vld [vmem:[#allocation9 + $0x5c] sm:$0xf]
    %v1973 = vld [vmem:[#allocation9 + $0x60] sm:$0xff]
    %v1974 = vld [vmem:[#allocation9 + $0x68] sm:$0xf]
    %v1975 = vld [vmem:[#allocation9 + $0x6c] sm:$0xff]
    %v1976 = vld [vmem:[#allocation9 + $0x74] sm:$0xf]
    %v1977 = vld [vmem:[#allocation9 + $0x78] sm:$0xff]
    %v1978 = vld [vmem:[#allocation9 + $0x80] sm:$0xf]
    %v1979 = vld [vmem:[#allocation9 + $0x84] sm:$0xff]
    %v1980 = vld [vmem:[#allocation9 + $0x8c] sm:$0xf]
    %v1981 = vld [vmem:[#allocation9 + $0x90] sm:$0xff]
    %v1982 = vld [vmem:[#allocation9 + $0x98] sm:$0xf]
    %v1983 = vld [vmem:[#allocation9 + $0x9c] sm:$0xff]
    %v1984 = vld [vmem:[#allocation9 + $0xa4] sm:$0xf]
    %v1985 = vld [vmem:[#allocation9 + $0xa8] sm:$0xff]
    %v1986 = vld [vmem:[#allocation9 + $0xb0] sm:$0xf]
    %v1987 = vld [vmem:[#allocation9 + $0xb4] sm:$0xff]
    %v1988 = vld [vmem:[#allocation9 + $0xbc] sm:$0xf]
    %v1989 = vld [vmem:[%s5] sm:$0x7]
    %v2022 = vunpack.c.l.b16 %v1957
    %v2023 = vunpack.c.h.b16 %v1957
    %v2024 = vunpack.c.l.b16 %v1958
    %v2025 = vunpack.c.l.b16 %v1959
    %v2026 = vunpack.c.h.b16 %v1959
    %v2027 = vunpack.c.l.b16 %v1960
    %v2028 = vunpack.c.l.b16 %v1961
    %v2029 = vunpack.c.h.b16 %v1961
    %v2030 = vunpack.c.l.b16 %v1962
    %v2031 = vunpack.c.l.b16 %v1963
    %v2032 = vunpack.c.h.b16 %v1963
    %v2033 = vunpack.c.l.b16 %v1964
    %v2034 = vunpack.c.l.b16 %v1965
    %v2035 = vunpack.c.h.b16 %v1965
    %v2036 = vunpack.c.l.b16 %v1966
    %v2037 = vunpack.c.l.b16 %v1967
    %v2038 = vunpack.c.h.b16 %v1967
    %v2039 = vunpack.c.l.b16 %v1968
    %v2040 = vunpack.c.l.b16 %v1969
    %v2041 = vunpack.c.h.b16 %v1969
    %v2042 = vunpack.c.l.b16 %v1970
    %v2043 = vunpack.c.l.b16 %v1971
    %v2044 = vunpack.c.h.b16 %v1971
    %v2045 = vunpack.c.l.b16 %v1972
    %v2046 = vunpack.c.l.b16 %v1973
    %v2047 = vunpack.c.h.b16 %v1973
    %v2048 = vunpack.c.l.b16 %v1974
    %v2049 = vunpack.c.l.b16 %v1975
    %v2050 = vunpack.c.h.b16 %v1975
    %v2051 = vunpack.c.l.b16 %v1976
    %v2052 = vunpack.c.l.b16 %v1977
    %v2053 = vunpack.c.h.b16 %v1977
    %v2054 = vunpack.c.l.b16 %v1978
    %v2055 = vunpack.c.l.b16 %v1979
    %v2056 = vunpack.c.h.b16 %v1979
    %v2057 = vunpack.c.l.b16 %v1980
    %v2058 = vunpack.c.l.b16 %v1981
    %v2059 = vunpack.c.h.b16 %v1981
    %v2060 = vunpack.c.l.b16 %v1982
    %v2061 = vunpack.c.l.b16 %v1983
    %v2062 = vunpack.c.h.b16 %v1983
    %v2063 = vunpack.c.l.b16 %v1984
    %v2064 = vunpack.c.l.b16 %v1985
    %v2065 = vunpack.c.h.b16 %v1985
    %v2066 = vunpack.c.l.b16 %v1986
    %v2067 = vunpack.c.l.b16 %v1987
    %v2068 = vunpack.c.h.b16 %v1987
    %v2069 = vunpack.c.l.b16 %v1988
    %v2070 = vpack.c.b16 %v2025, %v2022
    %v2071 = vpack.c.b16 %v2026, %v2023
    %v2072 = vpack.c.b16 %v2027, %v2024
    %v2073 = vpack.c.b16 %v2031, %v2028
    %v2074 = vpack.c.b16 %v2032, %v2029
    %v2075 = vpack.c.b16 %v2033, %v2030
    %v2076 = vpack.c.b16 %v2037, %v2034
    %v2077 = vpack.c.b16 %v2038, %v2035
    %v2078 = vpack.c.b16 %v2039, %v2036
    %v2079 = vpack.c.b16 %v2043, %v2040
    %v2080 = vpack.c.b16 %v2044, %v2041
    %v2081 = vpack.c.b16 %v2045, %v2042
    %v2082 = vpack.c.b16 %v2049, %v2046
    %v2083 = vpack.c.b16 %v2050, %v2047
    %v2084 = vpack.c.b16 %v2051, %v2048
    %v2085 = vpack.c.b16 %v2055, %v2052
    %v2086 = vpack.c.b16 %v2056, %v2053
    %v2087 = vpack.c.b16 %v2057, %v2054
    %v2088 = vpack.c.b16 %v2061, %v2058
    %v2089 = vpack.c.b16 %v2062, %v2059
    %v2090 = vpack.c.b16 %v2063, %v2060
    %v2091 = vpack.c.b16 %v2067, %v2064
    %v2092 = vpack.c.b16 %v2068, %v2065
    %v2093 = vpack.c.b16 %v2069, %v2066
    %v2119 = vlaneseq
    %v2120 = vshrl.u32 %v2119, 7
    %v2121 = vsub.s32 0, %v2120
    %v2122 = vrot.slane %v1989, %v2121
    %v2123 = vlaneseq
    %v2124 = vshrl.u32 %v2123, 7
    %v2125 = vsub.s32 1, %v2124
    %v2126 = vrot.slane %v1989, %v2125
    %v2127 = vlaneseq
    %v2128 = vshrl.u32 %v2127, 7
    %v2129 = vsub.s32 2, %v2128
    %v2130 = vrot.slane %v1989, %v2129
    %2134 = vmatprep.subr.bf16.mxu0 %v2071
    %2135 = vmatpush1.bf16.msra.mxu0 %v2070
    %2136 = vmatprep.subr.bf16.mxu0 %v2074
    %2137 = vmatpush1.bf16.msra.mxu0 %v2073
    %2138 = vmatprep.subr.bf16.mxu0 %v2077
    %2139 = vmatpush1.bf16.msra.mxu0 %v2076
    %2140 = vmatprep.subr.bf16.mxu0 %v2080
    %2141 = vmatpush1.bf16.msra.mxu0 %v2079
    %2142 = vmatprep.subr.bf16.mxu0 %v2083
    %2143 = vmatpush1.bf16.msra.mxu0 %v2082
    %2144 = vmatprep.subr.bf16.mxu0 %v2086
    %2145 = vmatpush1.bf16.msra.mxu0 %v2085
    %2146 = vmatprep.subr.bf16.mxu0 %v2089
    %2147 = vmatpush1.bf16.msra.mxu0 %v2088
    %2148 = vmatprep.subr.bf16.mxu0 %v2092
    %2149 = vmatpush1.bf16.msra.mxu0 %v2091
    %2150 = vmatprep.subr.bf16.mxu0 0
    %2151 = vmatpush1.bf16.msra.mxu0 0
    %2152 = vmatprep.subr.bf16.mxu0 0
    %2153 = vmatpush1.bf16.msra.mxu0 0
    %2154 = vmatprep.subr.bf16.mxu0 0
    %2155 = vmatpush1.bf16.msra.mxu0 0
    %2156 = vmatprep.subr.bf16.mxu0 0
    %2157 = vmatpush1.bf16.msra.mxu0 0
    %2158 = vmatprep.subr.bf16.mxu0 0
    %2159 = vmatpush1.bf16.msra.mxu0 0
    %2160 = vmatprep.subr.bf16.mxu0 0
    %2161 = vmatpush1.bf16.msra.mxu0 0
    %2162 = vmatprep.subr.bf16.mxu0 0
    %2163 = vmatpush1.bf16.msra.mxu0 0
    %2164 = vmatprep.subr.bf16.mxu0 0
    %2165 = vmatpush1.bf16.msra.mxu0 0
    %2166 = vmatprep.mubr.bf16.mxu0 0
    %2167 = vmatmul.mubr.bf16.gmra.mrb[0].mxu0 %v1956
    %v2168 = vpop.f32.mrb[0].mxu0
    %v2169 = vadd.f32 %v2122, %v2168
    %v2170 = vpop.f32.mrb[0].mxu0
    %v2171 = vadd.f32 %v2126, %v2170
    %v2172 = vpop.f32.mrb[0].mxu0
    %v2173 = vpop.f32.mrb[0].mxu0
    %2174 = vdwg.mxu0
    %2175 = vmatprep.subr.bf16.mxu0 0
    %2176 = vmatpush1.bf16.msra.mxu0 %v2072
    %2177 = vmatprep.subr.bf16.mxu0 0
    %2178 = vmatpush1.bf16.msra.mxu0 %v2075
    %2179 = vmatprep.subr.bf16.mxu0 0
    %2180 = vmatpush1.bf16.msra.mxu0 %v2078
    %2181 = vmatprep.subr.bf16.mxu0 0
    %2182 = vmatpush1.bf16.msra.mxu0 %v2081
    %2183 = vmatprep.subr.bf16.mxu0 0
    %2184 = vmatpush1.bf16.msra.mxu0 %v2084
    %2185 = vmatprep.subr.bf16.mxu0 0
    %2186 = vmatpush1.bf16.msra.mxu0 %v2087
    %2187 = vmatprep.subr.bf16.mxu0 0
    %2188 = vmatpush1.bf16.msra.mxu0 %v2090
    %2189 = vmatprep.subr.bf16.mxu0 0
    %2190 = vmatpush1.bf16.msra.mxu0 %v2093
    %2191 = vmatprep.subr.bf16.mxu0 0
    %2192 = vmatpush1.bf16.msra.mxu0 0
    %2193 = vmatprep.subr.bf16.mxu0 0
    %2194 = vmatpush1.bf16.msra.mxu0 0
    %2195 = vmatprep.subr.bf16.mxu0 0
    %2196 = vmatpush1.bf16.msra.mxu0 0
    %2197 = vmatprep.subr.bf16.mxu0 0
    %2198 = vmatpush1.bf16.msra.mxu0 0
    %2199 = vmatprep.subr.bf16.mxu0 0
    %2200 = vmatpush1.bf16.msra.mxu0 0
    %2201 = vmatprep.subr.bf16.mxu0 0
    %2202 = vmatpush1.bf16.msra.mxu0 0
    %2203 = vmatprep.subr.bf16.mxu0 0
    %2204 = vmatpush1.bf16.msra.mxu0 0
    %2205 = vmatprep.subr.bf16.mxu0 0
    %2206 = vmatpush1.bf16.msra.mxu0 0
    %2207 = vmatprep.mubr.bf16.mxu0 0
    %2208 = vmatmul.mubr.bf16.gmra.mrb[0].mxu0 %v1956
    %v2209 = vpop.f32.mrb[0].mxu0
    %v2210 = vadd.f32 %v2130, %v2209
    %v2211 = vpop.f32.mrb[0].mxu0
    %v2212 = vpop.f32.mrb[0].mxu0
    %v2213 = vpop.f32.mrb[0].mxu0
    %2214 = vdwg.mxu0
    %s2215 = scalar_lea.vmem [#allocation2], 6
    %v2216 = vld [vmem:[%s2215] ss:$8 sm:$0x7]
    %v2217 = vadd.f32 %v2216, %v2169
    %v2218 = vxor.u32 %v2217, 2147483648
    %v2219 = vmul.f32 %v2218, 1.442695
    %v2220 = vpow.pop %v2219
    %v2221 = vadd.f32 %v2220, 1.0
    %v2222 = vrcp.pop %v2221
    %v2223 = vmul.f32 1.0, %v2222
    %v2225 = vrot.slane %v2216, 1
    %v2227 = vadd.f32 %v2225, %v2171
    %v2228 = vxor.u32 %v2227, 2147483648
    %v2229 = vmul.f32 %v2228, 1.442695
    %v2230 = vpow.pop %v2229
    %v2231 = vadd.f32 %v2230, 1.0
    %v2232 = vrcp.pop %v2231
    %v2233 = vmul.f32 1.0, %v2232
    %v2234 = vmul.f32 %v2223, %v2210
    %v2235 = vrot.slane %v2216, 2
    %v2237 = vadd.f32 %v2235, %v2234
    %v2238 = vtanh.pop %v2237
    %v2239 = vsub.f32 1.0, %v2233
    %v2240 = vmul.f32 %v2239, %v2238
    %v2241 = vmul.f32 %v2233, %v1955
    %v2242 = vadd.f32 %v2240, %v2241
    %2243 = vst [vmem:[#allocation3] sm:$0x1] %v2242
    %2244 = vst [vmem:[#allocation10 + $0x6] sm:$0x1] %v2242
    %v2245 = vld [vmem:[#allocation3] sm:$0x1]
    %v2246 = vpack.c.bf16 %v2245, %v2245
    %v2247 = vld [vmem:[#allocation9] sm:$0xff]
    %v2248 = vld [vmem:[#allocation9 + $0x8] sm:$0xf]
    %v2249 = vld [vmem:[#allocation9 + $0xc] sm:$0xff]
    %v2250 = vld [vmem:[#allocation9 + $0x14] sm:$0xf]
    %v2251 = vld [vmem:[#allocation9 + $0x18] sm:$0xff]
    %v2252 = vld [vmem:[#allocation9 + $0x20] sm:$0xf]
    %v2253 = vld [vmem:[#allocation9 + $0x24] sm:$0xff]
    %v2254 = vld [vmem:[#allocation9 + $0x2c] sm:$0xf]
    %v2255 = vld [vmem:[#allocation9 + $0x30] sm:$0xff]
    %v2256 = vld [vmem:[#allocation9 + $0x38] sm:$0xf]
    %v2257 = vld [vmem:[#allocation9 + $0x3c] sm:$0xff]
    %v2258 = vld [vmem:[#allocation9 + $0x44] sm:$0xf]
    %v2259 = vld [vmem:[#allocation9 + $0x48] sm:$0xff]
    %v2260 = vld [vmem:[#allocation9 + $0x50] sm:$0xf]
    %v2261 = vld [vmem:[#allocation9 + $0x54] sm:$0xff]
    %v2262 = vld [vmem:[#allocation9 + $0x5c] sm:$0xf]
    %v2263 = vld [vmem:[#allocation9 + $0x60] sm:$0xff]
    %v2264 = vld [vmem:[#allocation9 + $0x68] sm:$0xf]
    %v2265 = vld [vmem:[#allocation9 + $0x6c] sm:$0xff]
    %v2266 = vld [vmem:[#allocation9 + $0x74] sm:$0xf]
    %v2267 = vld [vmem:[#allocation9 + $0x78] sm:$0xff]
    %v2268 = vld [vmem:[#allocation9 + $0x80] sm:$0xf]
    %v2269 = vld [vmem:[#allocation9 + $0x84] sm:$0xff]
    %v2270 = vld [vmem:[#allocation9 + $0x8c] sm:$0xf]
    %v2271 = vld [vmem:[#allocation9 + $0x90] sm:$0xff]
    %v2272 = vld [vmem:[#allocation9 + $0x98] sm:$0xf]
    %v2273 = vld [vmem:[#allocation9 + $0x9c] sm:$0xff]
    %v2274 = vld [vmem:[#allocation9 + $0xa4] sm:$0xf]
    %v2275 = vld [vmem:[#allocation9 + $0xa8] sm:$0xff]
    %v2276 = vld [vmem:[#allocation9 + $0xb0] sm:$0xf]
    %v2277 = vld [vmem:[#allocation9 + $0xb4] sm:$0xff]
    %v2278 = vld [vmem:[#allocation9 + $0xbc] sm:$0xf]
    %v2279 = vld [vmem:[%s5] sm:$0x7]
    %v2312 = vunpack.c.l.b16 %v2247
    %v2313 = vunpack.c.h.b16 %v2247
    %v2314 = vunpack.c.l.b16 %v2248
    %v2315 = vunpack.c.l.b16 %v2249
    %v2316 = vunpack.c.h.b16 %v2249
    %v2317 = vunpack.c.l.b16 %v2250
    %v2318 = vunpack.c.l.b16 %v2251
    %v2319 = vunpack.c.h.b16 %v2251
    %v2320 = vunpack.c.l.b16 %v2252
    %v2321 = vunpack.c.l.b16 %v2253
    %v2322 = vunpack.c.h.b16 %v2253
    %v2323 = vunpack.c.l.b16 %v2254
    %v2324 = vunpack.c.l.b16 %v2255
    %v2325 = vunpack.c.h.b16 %v2255
    %v2326 = vunpack.c.l.b16 %v2256
    %v2327 = vunpack.c.l.b16 %v2257
    %v2328 = vunpack.c.h.b16 %v2257
    %v2329 = vunpack.c.l.b16 %v2258
    %v2330 = vunpack.c.l.b16 %v2259
    %v2331 = vunpack.c.h.b16 %v2259
    %v2332 = vunpack.c.l.b16 %v2260
    %v2333 = vunpack.c.l.b16 %v2261
    %v2334 = vunpack.c.h.b16 %v2261
    %v2335 = vunpack.c.l.b16 %v2262
    %v2336 = vunpack.c.l.b16 %v2263
    %v2337 = vunpack.c.h.b16 %v2263
    %v2338 = vunpack.c.l.b16 %v2264
    %v2339 = vunpack.c.l.b16 %v2265
    %v2340 = vunpack.c.h.b16 %v2265
    %v2341 = vunpack.c.l.b16 %v2266
    %v2342 = vunpack.c.l.b16 %v2267
    %v2343 = vunpack.c.h.b16 %v2267
    %v2344 = vunpack.c.l.b16 %v2268
    %v2345 = vunpack.c.l.b16 %v2269
    %v2346 = vunpack.c.h.b16 %v2269
    %v2347 = vunpack.c.l.b16 %v2270
    %v2348 = vunpack.c.l.b16 %v2271
    %v2349 = vunpack.c.h.b16 %v2271
    %v2350 = vunpack.c.l.b16 %v2272
    %v2351 = vunpack.c.l.b16 %v2273
    %v2352 = vunpack.c.h.b16 %v2273
    %v2353 = vunpack.c.l.b16 %v2274
    %v2354 = vunpack.c.l.b16 %v2275
    %v2355 = vunpack.c.h.b16 %v2275
    %v2356 = vunpack.c.l.b16 %v2276
    %v2357 = vunpack.c.l.b16 %v2277
    %v2358 = vunpack.c.h.b16 %v2277
    %v2359 = vunpack.c.l.b16 %v2278
    %v2360 = vpack.c.b16 %v2315, %v2312
    %v2361 = vpack.c.b16 %v2316, %v2313
    %v2362 = vpack.c.b16 %v2317, %v2314
    %v2363 = vpack.c.b16 %v2321, %v2318
    %v2364 = vpack.c.b16 %v2322, %v2319
    %v2365 = vpack.c.b16 %v2323, %v2320
    %v2366 = vpack.c.b16 %v2327, %v2324
    %v2367 = vpack.c.b16 %v2328, %v2325
    %v2368 = vpack.c.b16 %v2329, %v2326
    %v2369 = vpack.c.b16 %v2333, %v2330
    %v2370 = vpack.c.b16 %v2334, %v2331
    %v2371 = vpack.c.b16 %v2335, %v2332
    %v2372 = vpack.c.b16 %v2339, %v2336
    %v2373 = vpack.c.b16 %v2340, %v2337
    %v2374 = vpack.c.b16 %v2341, %v2338
    %v2375 = vpack.c.b16 %v2345, %v2342
    %v2376 = vpack.c.b16 %v2346, %v2343
    %v2377 = vpack.c.b16 %v2347, %v2344
    %v2378 = vpack.c.b16 %v2351, %v2348
    %v2379 = vpack.c.b16 %v2352, %v2349
    %v2380 = vpack.c.b16 %v2353, %v2350
    %v2381 = vpack.c.b16 %v2357, %v2354
    %v2382 = vpack.c.b16 %v2358, %v2355
    %v2383 = vpack.c.b16 %v2359, %v2356
    %v2409 = vlaneseq
    %v2410 = vshrl.u32 %v2409, 7
    %v2411 = vsub.s32 0, %v2410
    %v2412 = vrot.slane %v2279, %v2411
    %v2413 = vlaneseq
    %v2414 = vshrl.u32 %v2413, 7
    %v2415 = vsub.s32 1, %v2414
    %v2416 = vrot.slane %v2279, %v2415
    %v2417 = vlaneseq
    %v2418 = vshrl.u32 %v2417, 7
    %v2419 = vsub.s32 2, %v2418
    %v2420 = vrot.slane %v2279, %v2419
    %2424 = vmatprep.subr.bf16.mxu0 %v2361
    %2425 = vmatpush1.bf16.msra.mxu0 %v2360
    %2426 = vmatprep.subr.bf16.mxu0 %v2364
    %2427 = vmatpush1.bf16.msra.mxu0 %v2363
    %2428 = vmatprep.subr.bf16.mxu0 %v2367
    %2429 = vmatpush1.bf16.msra.mxu0 %v2366
    %2430 = vmatprep.subr.bf16.mxu0 %v2370
    %2431 = vmatpush1.bf16.msra.mxu0 %v2369
    %2432 = vmatprep.subr.bf16.mxu0 %v2373
    %2433 = vmatpush1.bf16.msra.mxu0 %v2372
    %2434 = vmatprep.subr.bf16.mxu0 %v2376
    %2435 = vmatpush1.bf16.msra.mxu0 %v2375
    %2436 = vmatprep.subr.bf16.mxu0 %v2379
    %2437 = vmatpush1.bf16.msra.mxu0 %v2378
    %2438 = vmatprep.subr.bf16.mxu0 %v2382
    %2439 = vmatpush1.bf16.msra.mxu0 %v2381
    %2440 = vmatprep.subr.bf16.mxu0 0
    %2441 = vmatpush1.bf16.msra.mxu0 0
    %2442 = vmatprep.subr.bf16.mxu0 0
    %2443 = vmatpush1.bf16.msra.mxu0 0
    %2444 = vmatprep.subr.bf16.mxu0 0
    %2445 = vmatpush1.bf16.msra.mxu0 0
    %2446 = vmatprep.subr.bf16.mxu0 0
    %2447 = vmatpush1.bf16.msra.mxu0 0
    %2448 = vmatprep.subr.bf16.mxu0 0
    %2449 = vmatpush1.bf16.msra.mxu0 0
    %2450 = vmatprep.subr.bf16.mxu0 0
    %2451 = vmatpush1.bf16.msra.mxu0 0
    %2452 = vmatprep.subr.bf16.mxu0 0
    %2453 = vmatpush1.bf16.msra.mxu0 0
    %2454 = vmatprep.subr.bf16.mxu0 0
    %2455 = vmatpush1.bf16.msra.mxu0 0
    %2456 = vmatprep.mubr.bf16.mxu0 0
    %2457 = vmatmul.mubr.bf16.gmra.mrb[0].mxu0 %v2246
    %v2458 = vpop.f32.mrb[0].mxu0
    %v2459 = vadd.f32 %v2412, %v2458
    %v2460 = vpop.f32.mrb[0].mxu0
    %v2461 = vadd.f32 %v2416, %v2460
    %v2462 = vpop.f32.mrb[0].mxu0
    %v2463 = vpop.f32.mrb[0].mxu0
    %2464 = vdwg.mxu0
    %2465 = vmatprep.subr.bf16.mxu0 0
    %2466 = vmatpush1.bf16.msra.mxu0 %v2362
    %2467 = vmatprep.subr.bf16.mxu0 0
    %2468 = vmatpush1.bf16.msra.mxu0 %v2365
    %2469 = vmatprep.subr.bf16.mxu0 0
    %2470 = vmatpush1.bf16.msra.mxu0 %v2368
    %2471 = vmatprep.subr.bf16.mxu0 0
    %2472 = vmatpush1.bf16.msra.mxu0 %v2371
    %2473 = vmatprep.subr.bf16.mxu0 0
    %2474 = vmatpush1.bf16.msra.mxu0 %v2374
    %2475 = vmatprep.subr.bf16.mxu0 0
    %2476 = vmatpush1.bf16.msra.mxu0 %v2377
    %2477 = vmatprep.subr.bf16.mxu0 0
    %2478 = vmatpush1.bf16.msra.mxu0 %v2380
    %2479 = vmatprep.subr.bf16.mxu0 0
    %2480 = vmatpush1.bf16.msra.mxu0 %v2383
    %2481 = vmatprep.subr.bf16.mxu0 0
    %2482 = vmatpush1.bf16.msra.mxu0 0
    %2483 = vmatprep.subr.bf16.mxu0 0
    %2484 = vmatpush1.bf16.msra.mxu0 0
    %2485 = vmatprep.subr.bf16.mxu0 0
    %2486 = vmatpush1.bf16.msra.mxu0 0
    %2487 = vmatprep.subr.bf16.mxu0 0
    %2488 = vmatpush1.bf16.msra.mxu0 0
    %2489 = vmatprep.subr.bf16.mxu0 0
    %2490 = vmatpush1.bf16.msra.mxu0 0
    %2491 = vmatprep.subr.bf16.mxu0 0
    %2492 = vmatpush1.bf16.msra.mxu0 0
    %2493 = vmatprep.subr.bf16.mxu0 0
    %2494 = vmatpush1.bf16.msra.mxu0 0
    %2495 = vmatprep.subr.bf16.mxu0 0
    %2496 = vmatpush1.bf16.msra.mxu0 0
    %2497 = vmatprep.mubr.bf16.mxu0 0
    %2498 = vmatmul.mubr.bf16.gmra.mrb[0].mxu0 %v2246
    %v2499 = vpop.f32.mrb[0].mxu0
    %v2500 = vadd.f32 %v2420, %v2499
    %v2501 = vpop.f32.mrb[0].mxu0
    %v2502 = vpop.f32.mrb[0].mxu0
    %v2503 = vpop.f32.mrb[0].mxu0
    %2504 = vdwg.mxu0
    %s2505 = scalar_lea.vmem [#allocation2], 7
    %v2506 = vld [vmem:[%s2505] ss:$8 sm:$0x7]
    %v2507 = vadd.f32 %v2506, %v2459
    %v2508 = vxor.u32 %v2507, 2147483648
    %v2509 = vmul.f32 %v2508, 1.442695
    %v2510 = vpow.pop %v2509
    %v2511 = vadd.f32 %v2510, 1.0
    %v2512 = vrcp.pop %v2511
    %v2513 = vmul.f32 1.0, %v2512
    %v2515 = vrot.slane %v2506, 1
    %v2517 = vadd.f32 %v2515, %v2461
    %v2518 = vxor.u32 %v2517, 2147483648
    %v2519 = vmul.f32 %v2518, 1.442695
    %v2520 = vpow.pop %v2519
    %v2521 = vadd.f32 %v2520, 1.0
    %v2522 = vrcp.pop %v2521
    %v2523 = vmul.f32 1.0, %v2522
    %v2524 = vmul.f32 %v2513, %v2500
    %v2525 = vrot.slane %v2506, 2
    %v2527 = vadd.f32 %v2525, %v2524
    %v2528 = vtanh.pop %v2527
    %v2529 = vsub.f32 1.0, %v2523
    %v2530 = vmul.f32 %v2529, %v2528
    %v2531 = vmul.f32 %v2523, %v2245
    %v2532 = vadd.f32 %v2530, %v2531
    %2533 = vst [vmem:[#allocation3] sm:$0x1] %v2532
    %2534 = vst [vmem:[#allocation10 + $0x7] sm:$0x1] %v2532
    %v2535 = vld [vmem:[#allocation3] sm:$0x1]
    %2536 = vst [vmem:[#allocation11] sm:$0x1] %v2535
    // Predicated region
    $region38: #{tpu_custom_call.1} parent=1 // pred_check
      _
    $region39: #{tpu_custom_call.1} parent=1 // pred_check_branch
      %2538 = sbr.rel (0) target = $region41
    $region40: #{tpu_custom_call.1} parent=1 // pred_region
      %s2540 = ssub.s32 128, 128
      %2541 = vsyncadd [#allocation6], %s2540
      %s2543 = sshll.u32 [#allocation10], 4
      %s2544 = int_to_ptr.vmem [resolvable:$true] %s2543
      %2546 = dma.vmem_to_hbm [thread:$0]  %s2544, 128, %s6, [#allocation6]
    $region41: #{tpu_custom_call.1} parent=1 // pred_fallthru
      _
    // Predicated region
    $region42: #{tpu_custom_call.1} parent=1 // pred_check
      _
    $region43: #{tpu_custom_call.1} parent=1 // pred_check_branch
      %2548 = sbr.rel (0) target = $region45
    $region44: #{tpu_custom_call.1} parent=1 // pred_region
      %s2550 = ssub.s32 16, 16
      %2551 = vsyncadd [#allocation12], %s2550
      %s2553 = sshll.u32 [#allocation11], 4
      %s2554 = int_to_ptr.vmem [resolvable:$true] %s2553
      %2556 = dma.vmem_to_hbm [thread:$0]  %s2554, 16, %s7, [#allocation12]
    $region45: #{tpu_custom_call.1} parent=1 // pred_fallthru
      _
    // Predicated region
    $region46: #{tpu_custom_call.1} parent=1 // pred_check
      _
    $region47: #{tpu_custom_call.1} parent=1 // pred_check_branch
      %2558 = sbr.rel (0) target = $region49
    $region48: #{tpu_custom_call.1} parent=1 // pred_region
      %2559 = dma.done [#allocation6], 128
    $region49: #{tpu_custom_call.1} parent=1 // pred_fallthru
      _
    // Predicated region
    $region50: #{tpu_custom_call.1} parent=1 // pred_check
      _
    $region51: #{tpu_custom_call.1} parent=1 // pred_check_branch
      %2561 = sbr.rel (0) target = $region53
    $region52: #{tpu_custom_call.1} parent=1 // pred_region
      %2562 = dma.done [#allocation12], 16
    $region53: #{tpu_custom_call.1} parent=1 // pred_fallthru
      _
    %2563 = vsyncpa [#allocation5], 1
    %2564 = vsyncpa [#allocation8], 1
    %2565 = vsyncpa [#allocation6], 1
    %2566 = vsyncpa [#allocation12], 1

</llo_original>
